<compile_context>
chip_gen: v5e
topology: v5e:2x2
jax: 0.10.0
libtpu: 0.0.40
codegen_flags: <defaults>
</compile_context>

<pallas_src>
import functools

import jax
import jax.numpy as jnp
from jax import lax
from jax.experimental import pallas as pl
from jax.experimental.pallas import tpu as pltpu

C1 = 128        # first conv output channels
C2 = 768        # second conv output channels
CHUNK_C = 128   # in-channel chunk width (lane dim)
POOL_K = 5      # AvgPool2d kernel
POOL_S = 2      # AvgPool2d stride
BN_EPS = 1e-5   # PyTorch BatchNorm2d default eps


def _round_up(x, m):
    return ((x + m - 1) // m) * m


# ----------------------------- Pallas kernel ------------------------------- #
def _aux_head_kernel(x_ref, w1_ref, b1c_ref, w2_ref, b2_ref, wc_ref, bc_ref,
                     out_ref, h1_ref, *, width):
    # x_ref: (H*W, TILE_B, 128) bf16 -- one 128-channel chunk of one batch tile.
    k = pl.program_id(1)
    tile_b = x_ref.shape[1]

    def tap(r, c):
        # ReLU(inplace=True) per spatial tap; accumulate the pool in f32
        # (v5e has no bf16 VALU; f32 also keeps the numerics tight).
        return jnp.maximum(x_ref[r * width + c].astype(jnp.float32), 0.0)

    # AvgPool2d(5, stride=2): 4 output positions (i, j) -> rows 2i..2i+4,
    # cols 2j..2j+4.  Horizontal partial sums are shared between the two
    # column windows, vertical accumulation between the two row windows.
    # The 1/25 normalization is folded into w1 on the host.  All accumulators
    # here are (TILE_B, 128) f32, small enough to live in vregs.
    zero = jnp.zeros((tile_b, CHUNK_C), jnp.float32)
    p = [zero, zero, zero, zero]          # order: (0,0), (0,1), (1,0), (1,1)
    for r in range(7):
        mid = tap(r, 2) + tap(r, 3) + tap(r, 4)
        left = mid + tap(r, 0) + tap(r, 1)      # cols 0..4
        right = mid + tap(r, 5) + tap(r, 6)     # cols 2..6
        if r <= 4:                              # rows 0..4 -> output row i=0
            p[0] = p[0] + left
            p[1] = p[1] + right
        if r >= 2:                              # rows 2..6 -> output row i=1
            p[2] = p[2] + left
            p[3] = p[3] + right

    # K-accumulating Conv2d(C,128,1,bias=False) (pool scale + BN1 scale folded
    # into w1): accumulate this chunk's contribution into the VMEM scratch.
    @pl.when(k == 0)
    def _():
        h1_ref[...] = jnp.zeros_like(h1_ref)

    w1 = w1_ref[...]                            # (128, 128) bf16
    for q in range(4):
        h1_ref[:, pl.ds(q * C1, C1)] += jnp.dot(
            p[q].astype(jnp.bfloat16), w1, preferred_element_type=jnp.float32)

    # Epilogue at the last channel chunk: BN1 bias + ReLU, Conv2d(128,768,2)
    # as one K=512 matmul (BN2 scale folded), BN2 bias + ReLU, classifier.
    @pl.when(k == pl.num_programs(1) - 1)
    def _():
        h1c = jnp.maximum(h1_ref[...] + b1c_ref[...], 0.0).astype(jnp.bfloat16)
        h2 = jnp.dot(h1c, w2_ref[...], preferred_element_type=jnp.float32)
        h2 = jnp.maximum(h2 + b2_ref[...], 0.0).astype(jnp.bfloat16)
        out_ref[...] = (jnp.dot(h2, wc_ref[...],
                                preferred_element_type=jnp.float32)
                        + bc_ref[...])


def _const_spec(shape):
    return pl.BlockSpec(shape, lambda b, k: (0,) * len(shape))


def _pick_tile_b(batch):
    # Multiple of 8 sublanes, capped at 64 rows/step; aim for >= 4 grid steps
    # along the batch axis so DMA double-buffering (and v7x megacore) engages.
    if batch <= 8:
        return 8
    return max(8, min(64, _round_up((batch + 3) // 4, 8)))


def _vmem_limit_bytes(tile_b, hw, nc_pad):
    # Estimate scoped-VMEM need from the actual (double-buffered) block sizes,
    # with headroom; stays well under v7x's 64 MiB/TC budget.
    def blk(r, c, itemsize):
        return _round_up(r, 8) * _round_up(c, 128) * itemsize

    per_step = (2 * hw * blk(tile_b, CHUNK_C, 2)   # x chunk (double buffered)
                + 2 * blk(CHUNK_C, C1, 2)          # w1 chunk
                + 2 * blk(1, 4 * C1, 4)            # b1 (tiled)
                + 2 * blk(4 * C1, C2, 2)           # w2
                + 2 * blk(1, C2, 4)                # b2
                + 2 * blk(C2, nc_pad, 2)           # wc
                + 2 * blk(1, nc_pad, 4)            # bc
                + 2 * blk(tile_b, nc_pad, 4)       # out
                + blk(tile_b, 4 * C1, 4))          # h1 scratch
    return min(max(2 * per_step + (4 << 20), 16 << 20), 32 << 20)


# ------------------------------ host wrapper -------------------------------- #
def aux_head_forward(x, params, num_classes):
    """x: (B, C, H, W) float32 NCHW.  Returns (B, num_classes) float32."""
    (w1m, b1c, w2m, b2, wcm, bcm) = params
    B, C, H, W = x.shape
    Ho = (H - POOL_K) // POOL_S + 1
    Wo = (W - POOL_K) // POOL_S + 1
    assert (Ho, Wo) == (2, 2), \
        "Linear(768, num_classes) requires a 2x2 pooled map (7x7 / 8x8 input)"
    c_pad = w1m.shape[0]                  # channels padded to multiple of 128
    nc_pad = wcm.shape[1]                 # classes padded to multiple of 128
    n_k = c_pad // CHUNK_C

    tile_b = _pick_tile_b(B)
    b_pad = _round_up(B, tile_b)

    # NCHW -> (n_chunks, H*W, B_pad, 128) bf16: dense lanes, dense per-step DMA.
    xt = jnp.transpose(x, (2, 3, 0, 1)).reshape(H * W, B, C)
    xt = jnp.pad(xt, ((0, 0), (0, b_pad - B), (0, c_pad - C)))
    xt = xt.reshape(H * W, b_pad, n_k, CHUNK_C).transpose(2, 0, 1, 3)
    xt = xt.astype(jnp.bfloat16)

    kernel = functools.partial(_aux_head_kernel, width=W)
    grid = (b_pad // tile_b, n_k)

    out = pl.pallas_call(
        kernel,
        grid_spec=pltpu.PrefetchScalarGridSpec(
            num_scalar_prefetch=0,
            grid=grid,
            in_specs=[
                pl.BlockSpec((None, H * W, tile_b, CHUNK_C),
                             lambda b, k: (k, 0, b, 0)),
                pl.BlockSpec((CHUNK_C, C1), lambda b, k: (k, 0)),
                _const_spec(b1c.shape),
                _const_spec(w2m.shape),
                _const_spec(b2.shape),
                _const_spec(wcm.shape),
                _const_spec(bcm.shape),
            ],
            out_specs=pl.BlockSpec((tile_b, nc_pad), lambda b, k: (b, 0)),
            scratch_shapes=[pltpu.VMEM((tile_b, 4 * C1), jnp.float32)],
        ),
        out_shape=jax.ShapeDtypeStruct((b_pad, nc_pad), jnp.float32),
        compiler_params=pltpu.CompilerParams(
            dimension_semantics=("parallel", "arbitrary"),
            vmem_limit_bytes=_vmem_limit_bytes(tile_b, H * W, nc_pad)),
    )(xt, w1m, b1c, w2m, b2, wcm, bcm)

    return out[:B, :num_classes]


# ------------------------ deterministic parameter init ---------------------- #
def make_params(key, C, num_classes):
    ks = jax.random.split(key, 12)
    return dict(
        w1=jax.random.normal(ks[0], (C1, C, 1, 1), jnp.float32) * 0.1,
        g1=jax.random.uniform(ks[1], (C1,), jnp.float32, 0.5, 1.5),
        be1=jax.random.normal(ks[2], (C1,), jnp.float32) * 0.1,
        m1=jax.random.normal(ks[3], (C1,), jnp.float32) * 0.1,
        v1=jax.random.uniform(ks[4], (C1,), jnp.float32, 0.5, 1.5),
        w2=jax.random.normal(ks[5], (C2, C1, 2, 2), jnp.float32) * 0.05,
        g2=jax.random.uniform(ks[6], (C2,), jnp.float32, 0.5, 1.5),
        be2=jax.random.normal(ks[7], (C2,), jnp.float32) * 0.1,
        m2=jax.random.normal(ks[8], (C2,), jnp.float32) * 0.1,
        v2=jax.random.uniform(ks[9], (C2,), jnp.float32, 0.5, 1.5),
        wc=jax.random.normal(ks[10], (num_classes, C2), jnp.float32) * 0.05,
        bc=jax.random.normal(ks[11], (num_classes,), jnp.float32) * 0.1,
    )


def fold_params(raw, C, num_classes):
    # BN (eval mode) -> per-channel scale/bias; scales are folded into the
    # bf16 matmul weights (per-output-channel scale commutes with the matmul).
    s1 = raw["g1"] / jnp.sqrt(raw["v1"] + BN_EPS)
    b1 = raw["be1"] - raw["m1"] * s1
    s2 = raw["g2"] / jnp.sqrt(raw["v2"] + BN_EPS)
    b2 = raw["be2"] - raw["m2"] * s2

    c_pad = _round_up(C, CHUNK_C)
    nc_pad = _round_up(num_classes, 128)

    # 1x1 conv weight (C,128): 1/25 pool scale and BN1 scale folded in; rows
    # zero-padded to the channel-chunk multiple (padded channels contribute 0).
    w1f = raw["w1"].reshape(C1, C).T / float(POOL_K * POOL_K) * s1[None, :]
    w1m = jnp.zeros((c_pad, C1), jnp.float32).at[:C].set(w1f).astype(jnp.bfloat16)

    # BN1 bias tiled over the 4 conv2 taps (applied once on (TILE_B, 512)).
    b1c = jnp.tile(b1.reshape(1, C1), (1, 4))                      # (1, 512)

    # (O, I, kh, kw) -> (kh, kw, I, O) -> (512, 768); row = (kh*2+kw)*128 + c,
    # matching the kernel's tap order (0,0),(0,1),(1,0),(1,1); BN2 scale folded.
    w2m = (jnp.transpose(raw["w2"], (2, 3, 1, 0)).reshape(4 * C1, C2)
           * s2[None, :]).astype(jnp.bfloat16)

    # Classifier, lane-padded to a multiple of 128 for dense stores.
    wcm = jnp.zeros((C2, nc_pad), jnp.float32).at[:, :num_classes].set(
        raw["wc"].T).astype(jnp.bfloat16)
    bcm = jnp.zeros((1, nc_pad), jnp.float32).at[:, :num_classes].set(
        raw["bc"][None, :])

    return (w1m, b1c, w2m, b2.reshape(1, C2), wcm, bcm)


# ------------------------------ pure-JAX reference --------------------------- #
def reference_forward(x, raw):
    def bn(h, g, b, m, v):
        s = g / jnp.sqrt(v + BN_EPS)
        return h * s[None, :, None, None] + (b - m * s)[None, :, None, None]

    h = jnp.maximum(x, 0.0)
    h = lax.reduce_window(h, 0.0, lax.add, (1, 1, POOL_K, POOL_K),
                          (1, 1, POOL_S, POOL_S), "VALID") / float(POOL_K * POOL_K)
    h = lax.conv_general_dilated(h, raw["w1"], (1, 1), "VALID",
                                 dimension_numbers=("NCHW", "OIHW", "NCHW"))
    h = jnp.maximum(bn(h, raw["g1"], raw["be1"], raw["m1"], raw["v1"]), 0.0)
    h = lax.conv_general_dilated(h, raw["w2"], (1, 1), "VALID",
                                 dimension_numbers=("NCHW", "OIHW", "NCHW"))
    h = jnp.maximum(bn(h, raw["g2"], raw["be2"], raw["m2"], raw["v2"]), 0.0)
    h = h.reshape(h.shape[0], -1)                                   # (B, 768)
    return h @ raw["wc"].T + raw["bc"][None, :]


if __name__ == "__main__":
    B, C, H, W = 2, 4, 7, 7
    num_classes = 10

    key = jax.random.PRNGKey(0)
    kx, kp = jax.random.split(key)
    x = jax.random.normal(kx, (B, C, H, W), jnp.float32)
    raw = make_params(kp, C, num_classes)
    params = fold_params(raw, C, num_classes)

    out = jax.block_until_ready(aux_head_forward(x, params, num_classes))

    ref = reference_forward(x, raw)
    assert out.shape == (B, num_classes)
    err = float(jnp.max(jnp.abs(out - ref)))
    assert err < 2e-2, f"max abs error vs reference: {err}"
    print("KERNEL_OK")
</pallas_src>

<mosaic_0001>
module attributes {stable_mosaic.version = 11 : i64} {
  func.func @_aux_head_kernel(%arg0: i32, %arg1: i32, %arg2: memref<1x49x8x128xbf16, #tpu.memory_space<vmem>>, %arg3: memref<128x128xbf16, #tpu.memory_space<vmem>>, %arg4: memref<1x512xf32, #tpu.memory_space<vmem>>, %arg5: memref<512x768xbf16, #tpu.memory_space<vmem>>, %arg6: memref<1x768xf32, #tpu.memory_space<vmem>>, %arg7: memref<768x128xbf16, #tpu.memory_space<vmem>>, %arg8: memref<1x128xf32, #tpu.memory_space<vmem>>, %arg9: memref<8x128xf32, #tpu.memory_space<vmem>>, %arg10: memref<8x512xf32, #tpu.memory_space<vmem>>) attributes {dimension_semantics = [#tpu.dimension_semantics<parallel>, #tpu.dimension_semantics<arbitrary>], iteration_bounds = array<i64: 1, 1>, scalar_prefetch = 0 : i64, scratch_operands = 1 : i64, tpu.core_type = #tpu.core_type<tc>, window_params = [{transform_indices = @transform_0, window_bounds = array<i64: 1, 49, 8, 128>}, {transform_indices = @transform_1, window_bounds = array<i64: 128, 128>}, {pipeline_mode = #tpu.pipeline_mode<synchronous>, transform_indices = @transform_2, window_bounds = array<i64: 1, 512>}, {pipeline_mode = #tpu.pipeline_mode<synchronous>, transform_indices = @transform_3, window_bounds = array<i64: 512, 768>}, {pipeline_mode = #tpu.pipeline_mode<synchronous>, transform_indices = @transform_4, window_bounds = array<i64: 1, 768>}, {pipeline_mode = #tpu.pipeline_mode<synchronous>, transform_indices = @transform_5, window_bounds = array<i64: 768, 128>}, {pipeline_mode = #tpu.pipeline_mode<synchronous>, transform_indices = @transform_6, window_bounds = array<i64: 1, 128>}, {transform_indices = @transform_7, window_bounds = array<i64: 8, 128>}]} {
    %cst = arith.constant 0.000000e+00 : f32
    %0 = vector.broadcast %cst : f32 to vector<8x128xf32>
    %c0 = arith.constant 0 : index
    %c2 = arith.constant 2 : index
    %c0_0 = arith.constant 0 : index
    %c0_1 = arith.constant 0 : index
    %1 = vector.load %arg2[%c0, %c2, %c0_0, %c0_1] : memref<1x49x8x128xbf16, #tpu.memory_space<vmem>>, vector<1x1x8x128xbf16>
    %2 = vector.shape_cast %1 : vector<1x1x8x128xbf16> to vector<8x128xbf16>
    %3 = arith.extf %2 : vector<8x128xbf16> to vector<8x128xf32>
    %cst_2 = arith.constant 0.000000e+00 : f32
    %4 = vector.broadcast %cst_2 : f32 to vector<8x128xf32>
    %5 = arith.maximumf %3, %4 : vector<8x128xf32>
    %c0_3 = arith.constant 0 : index
    %c3 = arith.constant 3 : index
    %c0_4 = arith.constant 0 : index
    %c0_5 = arith.constant 0 : index
    %6 = vector.load %arg2[%c0_3, %c3, %c0_4, %c0_5] : memref<1x49x8x128xbf16, #tpu.memory_space<vmem>>, vector<1x1x8x128xbf16>
    %7 = vector.shape_cast %6 : vector<1x1x8x128xbf16> to vector<8x128xbf16>
    %8 = arith.extf %7 : vector<8x128xbf16> to vector<8x128xf32>
    %cst_6 = arith.constant 0.000000e+00 : f32
    %9 = vector.broadcast %cst_6 : f32 to vector<8x128xf32>
    %10 = arith.maximumf %8, %9 : vector<8x128xf32>
    %11 = arith.addf %5, %10 : vector<8x128xf32>
    %c0_7 = arith.constant 0 : index
    %c4 = arith.constant 4 : index
    %c0_8 = arith.constant 0 : index
    %c0_9 = arith.constant 0 : index
    %12 = vector.load %arg2[%c0_7, %c4, %c0_8, %c0_9] : memref<1x49x8x128xbf16, #tpu.memory_space<vmem>>, vector<1x1x8x128xbf16>
    %13 = vector.shape_cast %12 : vector<1x1x8x128xbf16> to vector<8x128xbf16>
    %14 = arith.extf %13 : vector<8x128xbf16> to vector<8x128xf32>
    %cst_10 = arith.constant 0.000000e+00 : f32
    %15 = vector.broadcast %cst_10 : f32 to vector<8x128xf32>
    %16 = arith.maximumf %14, %15 : vector<8x128xf32>
    %17 = arith.addf %11, %16 : vector<8x128xf32>
    %c0_11 = arith.constant 0 : index
    %c0_12 = arith.constant 0 : index
    %c0_13 = arith.constant 0 : index
    %c0_14 = arith.constant 0 : index
    %18 = vector.load %arg2[%c0_11, %c0_12, %c0_13, %c0_14] : memref<1x49x8x128xbf16, #tpu.memory_space<vmem>>, vector<1x1x8x128xbf16>
    %19 = vector.shape_cast %18 : vector<1x1x8x128xbf16> to vector<8x128xbf16>
    %20 = arith.extf %19 : vector<8x128xbf16> to vector<8x128xf32>
    %cst_15 = arith.constant 0.000000e+00 : f32
    %21 = vector.broadcast %cst_15 : f32 to vector<8x128xf32>
    %22 = arith.maximumf %20, %21 : vector<8x128xf32>
    %23 = arith.addf %17, %22 : vector<8x128xf32>
    %c0_16 = arith.constant 0 : index
    %c1 = arith.constant 1 : index
    %c0_17 = arith.constant 0 : index
    %c0_18 = arith.constant 0 : index
    %24 = vector.load %arg2[%c0_16, %c1, %c0_17, %c0_18] : memref<1x49x8x128xbf16, #tpu.memory_space<vmem>>, vector<1x1x8x128xbf16>
    %25 = vector.shape_cast %24 : vector<1x1x8x128xbf16> to vector<8x128xbf16>
    %26 = arith.extf %25 : vector<8x128xbf16> to vector<8x128xf32>
    %cst_19 = arith.constant 0.000000e+00 : f32
    %27 = vector.broadcast %cst_19 : f32 to vector<8x128xf32>
    %28 = arith.maximumf %26, %27 : vector<8x128xf32>
    %29 = arith.addf %23, %28 : vector<8x128xf32>
    %c0_20 = arith.constant 0 : index
    %c5 = arith.constant 5 : index
    %c0_21 = arith.constant 0 : index
    %c0_22 = arith.constant 0 : index
    %30 = vector.load %arg2[%c0_20, %c5, %c0_21, %c0_22] : memref<1x49x8x128xbf16, #tpu.memory_space<vmem>>, vector<1x1x8x128xbf16>
    %31 = vector.shape_cast %30 : vector<1x1x8x128xbf16> to vector<8x128xbf16>
    %32 = arith.extf %31 : vector<8x128xbf16> to vector<8x128xf32>
    %cst_23 = arith.constant 0.000000e+00 : f32
    %33 = vector.broadcast %cst_23 : f32 to vector<8x128xf32>
    %34 = arith.maximumf %32, %33 : vector<8x128xf32>
    %35 = arith.addf %17, %34 : vector<8x128xf32>
    %c0_24 = arith.constant 0 : index
    %c6 = arith.constant 6 : index
    %c0_25 = arith.constant 0 : index
    %c0_26 = arith.constant 0 : index
    %36 = vector.load %arg2[%c0_24, %c6, %c0_25, %c0_26] : memref<1x49x8x128xbf16, #tpu.memory_space<vmem>>, vector<1x1x8x128xbf16>
    %37 = vector.shape_cast %36 : vector<1x1x8x128xbf16> to vector<8x128xbf16>
    %38 = arith.extf %37 : vector<8x128xbf16> to vector<8x128xf32>
    %cst_27 = arith.constant 0.000000e+00 : f32
    %39 = vector.broadcast %cst_27 : f32 to vector<8x128xf32>
    %40 = arith.maximumf %38, %39 : vector<8x128xf32>
    %41 = arith.addf %35, %40 : vector<8x128xf32>
    %42 = arith.addf %0, %29 : vector<8x128xf32>
    %43 = arith.addf %0, %41 : vector<8x128xf32>
    %c0_28 = arith.constant 0 : index
    %c9 = arith.constant 9 : index
    %c0_29 = arith.constant 0 : index
    %c0_30 = arith.constant 0 : index
    %44 = vector.load %arg2[%c0_28, %c9, %c0_29, %c0_30] : memref<1x49x8x128xbf16, #tpu.memory_space<vmem>>, vector<1x1x8x128xbf16>
    %45 = vector.shape_cast %44 : vector<1x1x8x128xbf16> to vector<8x128xbf16>
    %46 = arith.extf %45 : vector<8x128xbf16> to vector<8x128xf32>
    %cst_31 = arith.constant 0.000000e+00 : f32
    %47 = vector.broadcast %cst_31 : f32 to vector<8x128xf32>
    %48 = arith.maximumf %46, %47 : vector<8x128xf32>
    %c0_32 = arith.constant 0 : index
    %c10 = arith.constant 10 : index
    %c0_33 = arith.constant 0 : index
    %c0_34 = arith.constant 0 : index
    %49 = vector.load %arg2[%c0_32, %c10, %c0_33, %c0_34] : memref<1x49x8x128xbf16, #tpu.memory_space<vmem>>, vector<1x1x8x128xbf16>
    %50 = vector.shape_cast %49 : vector<1x1x8x128xbf16> to vector<8x128xbf16>
    %51 = arith.extf %50 : vector<8x128xbf16> to vector<8x128xf32>
    %cst_35 = arith.constant 0.000000e+00 : f32
    %52 = vector.broadcast %cst_35 : f32 to vector<8x128xf32>
    %53 = arith.maximumf %51, %52 : vector<8x128xf32>
    %54 = arith.addf %48, %53 : vector<8x128xf32>
    %c0_36 = arith.constant 0 : index
    %c11 = arith.constant 11 : index
    %c0_37 = arith.constant 0 : index
    %c0_38 = arith.constant 0 : index
    %55 = vector.load %arg2[%c0_36, %c11, %c0_37, %c0_38] : memref<1x49x8x128xbf16, #tpu.memory_space<vmem>>, vector<1x1x8x128xbf16>
    %56 = vector.shape_cast %55 : vector<1x1x8x128xbf16> to vector<8x128xbf16>
    %57 = arith.extf %56 : vector<8x128xbf16> to vector<8x128xf32>
    %cst_39 = arith.constant 0.000000e+00 : f32
    %58 = vector.broadcast %cst_39 : f32 to vector<8x128xf32>
    %59 = arith.maximumf %57, %58 : vector<8x128xf32>
    %60 = arith.addf %54, %59 : vector<8x128xf32>
    %c0_40 = arith.constant 0 : index
    %c7 = arith.constant 7 : index
    %c0_41 = arith.constant 0 : index
    %c0_42 = arith.constant 0 : index
    %61 = vector.load %arg2[%c0_40, %c7, %c0_41, %c0_42] : memref<1x49x8x128xbf16, #tpu.memory_space<vmem>>, vector<1x1x8x128xbf16>
    %62 = vector.shape_cast %61 : vector<1x1x8x128xbf16> to vector<8x128xbf16>
    %63 = arith.extf %62 : vector<8x128xbf16> to vector<8x128xf32>
    %cst_43 = arith.constant 0.000000e+00 : f32
    %64 = vector.broadcast %cst_43 : f32 to vector<8x128xf32>
    %65 = arith.maximumf %63, %64 : vector<8x128xf32>
    %66 = arith.addf %60, %65 : vector<8x128xf32>
    %c0_44 = arith.constant 0 : index
    %c8 = arith.constant 8 : index
    %c0_45 = arith.constant 0 : index
    %c0_46 = arith.constant 0 : index
    %67 = vector.load %arg2[%c0_44, %c8, %c0_45, %c0_46] : memref<1x49x8x128xbf16, #tpu.memory_space<vmem>>, vector<1x1x8x128xbf16>
    %68 = vector.shape_cast %67 : vector<1x1x8x128xbf16> to vector<8x128xbf16>
    %69 = arith.extf %68 : vector<8x128xbf16> to vector<8x128xf32>
    %cst_47 = arith.constant 0.000000e+00 : f32
    %70 = vector.broadcast %cst_47 : f32 to vector<8x128xf32>
    %71 = arith.maximumf %69, %70 : vector<8x128xf32>
    %72 = arith.addf %66, %71 : vector<8x128xf32>
    %c0_48 = arith.constant 0 : index
    %c12 = arith.constant 12 : index
    %c0_49 = arith.constant 0 : index
    %c0_50 = arith.constant 0 : index
    %73 = vector.load %arg2[%c0_48, %c12, %c0_49, %c0_50] : memref<1x49x8x128xbf16, #tpu.memory_space<vmem>>, vector<1x1x8x128xbf16>
    %74 = vector.shape_cast %73 : vector<1x1x8x128xbf16> to vector<8x128xbf16>
    %75 = arith.extf %74 : vector<8x128xbf16> to vector<8x128xf32>
    %cst_51 = arith.constant 0.000000e+00 : f32
    %76 = vector.broadcast %cst_51 : f32 to vector<8x128xf32>
    %77 = arith.maximumf %75, %76 : vector<8x128xf32>
    %78 = arith.addf %60, %77 : vector<8x128xf32>
    %c0_52 = arith.constant 0 : index
    %c13 = arith.constant 13 : index
    %c0_53 = arith.constant 0 : index
    %c0_54 = arith.constant 0 : index
    %79 = vector.load %arg2[%c0_52, %c13, %c0_53, %c0_54] : memref<1x49x8x128xbf16, #tpu.memory_space<vmem>>, vector<1x1x8x128xbf16>
    %80 = vector.shape_cast %79 : vector<1x1x8x128xbf16> to vector<8x128xbf16>
    %81 = arith.extf %80 : vector<8x128xbf16> to vector<8x128xf32>
    %cst_55 = arith.constant 0.000000e+00 : f32
    %82 = vector.broadcast %cst_55 : f32 to vector<8x128xf32>
    %83 = arith.maximumf %81, %82 : vector<8x128xf32>
    %84 = arith.addf %78, %83 : vector<8x128xf32>
    %85 = arith.addf %42, %72 : vector<8x128xf32>
    %86 = arith.addf %43, %84 : vector<8x128xf32>
    %c0_56 = arith.constant 0 : index
    %c16 = arith.constant 16 : index
    %c0_57 = arith.constant 0 : index
    %c0_58 = arith.constant 0 : index
    %87 = vector.load %arg2[%c0_56, %c16, %c0_57, %c0_58] : memref<1x49x8x128xbf16, #tpu.memory_space<vmem>>, vector<1x1x8x128xbf16>
    %88 = vector.shape_cast %87 : vector<1x1x8x128xbf16> to vector<8x128xbf16>
    %89 = arith.extf %88 : vector<8x128xbf16> to vector<8x128xf32>
    %cst_59 = arith.constant 0.000000e+00 : f32
    %90 = vector.broadcast %cst_59 : f32 to vector<8x128xf32>
    %91 = arith.maximumf %89, %90 : vector<8x128xf32>
    %c0_60 = arith.constant 0 : index
    %c17 = arith.constant 17 : index
    %c0_61 = arith.constant 0 : index
    %c0_62 = arith.constant 0 : index
    %92 = vector.load %arg2[%c0_60, %c17, %c0_61, %c0_62] : memref<1x49x8x128xbf16, #tpu.memory_space<vmem>>, vector<1x1x8x128xbf16>
    %93 = vector.shape_cast %92 : vector<1x1x8x128xbf16> to vector<8x128xbf16>
    %94 = arith.extf %93 : vector<8x128xbf16> to vector<8x128xf32>
    %cst_63 = arith.constant 0.000000e+00 : f32
    %95 = vector.broadcast %cst_63 : f32 to vector<8x128xf32>
    %96 = arith.maximumf %94, %95 : vector<8x128xf32>
    %97 = arith.addf %91, %96 : vector<8x128xf32>
    %c0_64 = arith.constant 0 : index
    %c18 = arith.constant 18 : index
    %c0_65 = arith.constant 0 : index
    %c0_66 = arith.constant 0 : index
    %98 = vector.load %arg2[%c0_64, %c18, %c0_65, %c0_66] : memref<1x49x8x128xbf16, #tpu.memory_space<vmem>>, vector<1x1x8x128xbf16>
    %99 = vector.shape_cast %98 : vector<1x1x8x128xbf16> to vector<8x128xbf16>
    %100 = arith.extf %99 : vector<8x128xbf16> to vector<8x128xf32>
    %cst_67 = arith.constant 0.000000e+00 : f32
    %101 = vector.broadcast %cst_67 : f32 to vector<8x128xf32>
    %102 = arith.maximumf %100, %101 : vector<8x128xf32>
    %103 = arith.addf %97, %102 : vector<8x128xf32>
    %c0_68 = arith.constant 0 : index
    %c14 = arith.constant 14 : index
    %c0_69 = arith.constant 0 : index
    %c0_70 = arith.constant 0 : index
    %104 = vector.load %arg2[%c0_68, %c14, %c0_69, %c0_70] : memref<1x49x8x128xbf16, #tpu.memory_space<vmem>>, vector<1x1x8x128xbf16>
    %105 = vector.shape_cast %104 : vector<1x1x8x128xbf16> to vector<8x128xbf16>
    %106 = arith.extf %105 : vector<8x128xbf16> to vector<8x128xf32>
    %cst_71 = arith.constant 0.000000e+00 : f32
    %107 = vector.broadcast %cst_71 : f32 to vector<8x128xf32>
    %108 = arith.maximumf %106, %107 : vector<8x128xf32>
    %109 = arith.addf %103, %108 : vector<8x128xf32>
    %c0_72 = arith.constant 0 : index
    %c15 = arith.constant 15 : index
    %c0_73 = arith.constant 0 : index
    %c0_74 = arith.constant 0 : index
    %110 = vector.load %arg2[%c0_72, %c15, %c0_73, %c0_74] : memref<1x49x8x128xbf16, #tpu.memory_space<vmem>>, vector<1x1x8x128xbf16>
    %111 = vector.shape_cast %110 : vector<1x1x8x128xbf16> to vector<8x128xbf16>
    %112 = arith.extf %111 : vector<8x128xbf16> to vector<8x128xf32>
    %cst_75 = arith.constant 0.000000e+00 : f32
    %113 = vector.broadcast %cst_75 : f32 to vector<8x128xf32>
    %114 = arith.maximumf %112, %113 : vector<8x128xf32>
    %115 = arith.addf %109, %114 : vector<8x128xf32>
    %c0_76 = arith.constant 0 : index
    %c19 = arith.constant 19 : index
    %c0_77 = arith.constant 0 : index
    %c0_78 = arith.constant 0 : index
    %116 = vector.load %arg2[%c0_76, %c19, %c0_77, %c0_78] : memref<1x49x8x128xbf16, #tpu.memory_space<vmem>>, vector<1x1x8x128xbf16>
    %117 = vector.shape_cast %116 : vector<1x1x8x128xbf16> to vector<8x128xbf16>
    %118 = arith.extf %117 : vector<8x128xbf16> to vector<8x128xf32>
    %cst_79 = arith.constant 0.000000e+00 : f32
    %119 = vector.broadcast %cst_79 : f32 to vector<8x128xf32>
    %120 = arith.maximumf %118, %119 : vector<8x128xf32>
    %121 = arith.addf %103, %120 : vector<8x128xf32>
    %c0_80 = arith.constant 0 : index
    %c20 = arith.constant 20 : index
    %c0_81 = arith.constant 0 : index
    %c0_82 = arith.constant 0 : index
    %122 = vector.load %arg2[%c0_80, %c20, %c0_81, %c0_82] : memref<1x49x8x128xbf16, #tpu.memory_space<vmem>>, vector<1x1x8x128xbf16>
    %123 = vector.shape_cast %122 : vector<1x1x8x128xbf16> to vector<8x128xbf16>
    %124 = arith.extf %123 : vector<8x128xbf16> to vector<8x128xf32>
    %cst_83 = arith.constant 0.000000e+00 : f32
    %125 = vector.broadcast %cst_83 : f32 to vector<8x128xf32>
    %126 = arith.maximumf %124, %125 : vector<8x128xf32>
    %127 = arith.addf %121, %126 : vector<8x128xf32>
    %128 = arith.addf %85, %115 : vector<8x128xf32>
    %129 = arith.addf %86, %127 : vector<8x128xf32>
    %130 = arith.addf %0, %115 : vector<8x128xf32>
    %131 = arith.addf %0, %127 : vector<8x128xf32>
    %c0_84 = arith.constant 0 : index
    %c23 = arith.constant 23 : index
    %c0_85 = arith.constant 0 : index
    %c0_86 = arith.constant 0 : index
    %132 = vector.load %arg2[%c0_84, %c23, %c0_85, %c0_86] : memref<1x49x8x128xbf16, #tpu.memory_space<vmem>>, vector<1x1x8x128xbf16>
    %133 = vector.shape_cast %132 : vector<1x1x8x128xbf16> to vector<8x128xbf16>
    %134 = arith.extf %133 : vector<8x128xbf16> to vector<8x128xf32>
    %cst_87 = arith.constant 0.000000e+00 : f32
    %135 = vector.broadcast %cst_87 : f32 to vector<8x128xf32>
    %136 = arith.maximumf %134, %135 : vector<8x128xf32>
    %c0_88 = arith.constant 0 : index
    %c24 = arith.constant 24 : index
    %c0_89 = arith.constant 0 : index
    %c0_90 = arith.constant 0 : index
    %137 = vector.load %arg2[%c0_88, %c24, %c0_89, %c0_90] : memref<1x49x8x128xbf16, #tpu.memory_space<vmem>>, vector<1x1x8x128xbf16>
    %138 = vector.shape_cast %137 : vector<1x1x8x128xbf16> to vector<8x128xbf16>
    %139 = arith.extf %138 : vector<8x128xbf16> to vector<8x128xf32>
    %cst_91 = arith.constant 0.000000e+00 : f32
    %140 = vector.broadcast %cst_91 : f32 to vector<8x128xf32>
    %141 = arith.maximumf %139, %140 : vector<8x128xf32>
    %142 = arith.addf %136, %141 : vector<8x128xf32>
    %c0_92 = arith.constant 0 : index
    %c25 = arith.constant 25 : index
    %c0_93 = arith.constant 0 : index
    %c0_94 = arith.constant 0 : index
    %143 = vector.load %arg2[%c0_92, %c25, %c0_93, %c0_94] : memref<1x49x8x128xbf16, #tpu.memory_space<vmem>>, vector<1x1x8x128xbf16>
    %144 = vector.shape_cast %143 : vector<1x1x8x128xbf16> to vector<8x128xbf16>
    %145 = arith.extf %144 : vector<8x128xbf16> to vector<8x128xf32>
    %cst_95 = arith.constant 0.000000e+00 : f32
    %146 = vector.broadcast %cst_95 : f32 to vector<8x128xf32>
    %147 = arith.maximumf %145, %146 : vector<8x128xf32>
    %148 = arith.addf %142, %147 : vector<8x128xf32>
    %c0_96 = arith.constant 0 : index
    %c21 = arith.constant 21 : index
    %c0_97 = arith.constant 0 : index
    %c0_98 = arith.constant 0 : index
    %149 = vector.load %arg2[%c0_96, %c21, %c0_97, %c0_98] : memref<1x49x8x128xbf16, #tpu.memory_space<vmem>>, vector<1x1x8x128xbf16>
    %150 = vector.shape_cast %149 : vector<1x1x8x128xbf16> to vector<8x128xbf16>
    %151 = arith.extf %150 : vector<8x128xbf16> to vector<8x128xf32>
    %cst_99 = arith.constant 0.000000e+00 : f32
    %152 = vector.broadcast %cst_99 : f32 to vector<8x128xf32>
    %153 = arith.maximumf %151, %152 : vector<8x128xf32>
    %154 = arith.addf %148, %153 : vector<8x128xf32>
    %c0_100 = arith.constant 0 : index
    %c22 = arith.constant 22 : index
    %c0_101 = arith.constant 0 : index
    %c0_102 = arith.constant 0 : index
    %155 = vector.load %arg2[%c0_100, %c22, %c0_101, %c0_102] : memref<1x49x8x128xbf16, #tpu.memory_space<vmem>>, vector<1x1x8x128xbf16>
    %156 = vector.shape_cast %155 : vector<1x1x8x128xbf16> to vector<8x128xbf16>
    %157 = arith.extf %156 : vector<8x128xbf16> to vector<8x128xf32>
    %cst_103 = arith.constant 0.000000e+00 : f32
    %158 = vector.broadcast %cst_103 : f32 to vector<8x128xf32>
    %159 = arith.maximumf %157, %158 : vector<8x128xf32>
    %160 = arith.addf %154, %159 : vector<8x128xf32>
    %c0_104 = arith.constant 0 : index
    %c26 = arith.constant 26 : index
    %c0_105 = arith.constant 0 : index
    %c0_106 = arith.constant 0 : index
    %161 = vector.load %arg2[%c0_104, %c26, %c0_105, %c0_106] : memref<1x49x8x128xbf16, #tpu.memory_space<vmem>>, vector<1x1x8x128xbf16>
    %162 = vector.shape_cast %161 : vector<1x1x8x128xbf16> to vector<8x128xbf16>
    %163 = arith.extf %162 : vector<8x128xbf16> to vector<8x128xf32>
    %cst_107 = arith.constant 0.000000e+00 : f32
    %164 = vector.broadcast %cst_107 : f32 to vector<8x128xf32>
    %165 = arith.maximumf %163, %164 : vector<8x128xf32>
    %166 = arith.addf %148, %165 : vector<8x128xf32>
    %c0_108 = arith.constant 0 : index
    %c27 = arith.constant 27 : index
    %c0_109 = arith.constant 0 : index
    %c0_110 = arith.constant 0 : index
    %167 = vector.load %arg2[%c0_108, %c27, %c0_109, %c0_110] : memref<1x49x8x128xbf16, #tpu.memory_space<vmem>>, vector<1x1x8x128xbf16>
    %168 = vector.shape_cast %167 : vector<1x1x8x128xbf16> to vector<8x128xbf16>
    %169 = arith.extf %168 : vector<8x128xbf16> to vector<8x128xf32>
    %cst_111 = arith.constant 0.000000e+00 : f32
    %170 = vector.broadcast %cst_111 : f32 to vector<8x128xf32>
    %171 = arith.maximumf %169, %170 : vector<8x128xf32>
    %172 = arith.addf %166, %171 : vector<8x128xf32>
    %173 = arith.addf %128, %160 : vector<8x128xf32>
    %174 = arith.addf %129, %172 : vector<8x128xf32>
    %175 = arith.addf %130, %160 : vector<8x128xf32>
    %176 = arith.addf %131, %172 : vector<8x128xf32>
    %c0_112 = arith.constant 0 : index
    %c30 = arith.constant 30 : index
    %c0_113 = arith.constant 0 : index
    %c0_114 = arith.constant 0 : index
    %177 = vector.load %arg2[%c0_112, %c30, %c0_113, %c0_114] : memref<1x49x8x128xbf16, #tpu.memory_space<vmem>>, vector<1x1x8x128xbf16>
    %178 = vector.shape_cast %177 : vector<1x1x8x128xbf16> to vector<8x128xbf16>
    %179 = arith.extf %178 : vector<8x128xbf16> to vector<8x128xf32>
    %cst_115 = arith.constant 0.000000e+00 : f32
    %180 = vector.broadcast %cst_115 : f32 to vector<8x128xf32>
    %181 = arith.maximumf %179, %180 : vector<8x128xf32>
    %c0_116 = arith.constant 0 : index
    %c31 = arith.constant 31 : index
    %c0_117 = arith.constant 0 : index
    %c0_118 = arith.constant 0 : index
    %182 = vector.load %arg2[%c0_116, %c31, %c0_117, %c0_118] : memref<1x49x8x128xbf16, #tpu.memory_space<vmem>>, vector<1x1x8x128xbf16>
    %183 = vector.shape_cast %182 : vector<1x1x8x128xbf16> to vector<8x128xbf16>
    %184 = arith.extf %183 : vector<8x128xbf16> to vector<8x128xf32>
    %cst_119 = arith.constant 0.000000e+00 : f32
    %185 = vector.broadcast %cst_119 : f32 to vector<8x128xf32>
    %186 = arith.maximumf %184, %185 : vector<8x128xf32>
    %187 = arith.addf %181, %186 : vector<8x128xf32>
    %c0_120 = arith.constant 0 : index
    %c32 = arith.constant 32 : index
    %c0_121 = arith.constant 0 : index
    %c0_122 = arith.constant 0 : index
    %188 = vector.load %arg2[%c0_120, %c32, %c0_121, %c0_122] : memref<1x49x8x128xbf16, #tpu.memory_space<vmem>>, vector<1x1x8x128xbf16>
    %189 = vector.shape_cast %188 : vector<1x1x8x128xbf16> to vector<8x128xbf16>
    %190 = arith.extf %189 : vector<8x128xbf16> to vector<8x128xf32>
    %cst_123 = arith.constant 0.000000e+00 : f32
    %191 = vector.broadcast %cst_123 : f32 to vector<8x128xf32>
    %192 = arith.maximumf %190, %191 : vector<8x128xf32>
    %193 = arith.addf %187, %192 : vector<8x128xf32>
    %c0_124 = arith.constant 0 : index
    %c28 = arith.constant 28 : index
    %c0_125 = arith.constant 0 : index
    %c0_126 = arith.constant 0 : index
    %194 = vector.load %arg2[%c0_124, %c28, %c0_125, %c0_126] : memref<1x49x8x128xbf16, #tpu.memory_space<vmem>>, vector<1x1x8x128xbf16>
    %195 = vector.shape_cast %194 : vector<1x1x8x128xbf16> to vector<8x128xbf16>
    %196 = arith.extf %195 : vector<8x128xbf16> to vector<8x128xf32>
    %cst_127 = arith.constant 0.000000e+00 : f32
    %197 = vector.broadcast %cst_127 : f32 to vector<8x128xf32>
    %198 = arith.maximumf %196, %197 : vector<8x128xf32>
    %199 = arith.addf %193, %198 : vector<8x128xf32>
    %c0_128 = arith.constant 0 : index
    %c29 = arith.constant 29 : index
    %c0_129 = arith.constant 0 : index
    %c0_130 = arith.constant 0 : index
    %200 = vector.load %arg2[%c0_128, %c29, %c0_129, %c0_130] : memref<1x49x8x128xbf16, #tpu.memory_space<vmem>>, vector<1x1x8x128xbf16>
    %201 = vector.shape_cast %200 : vector<1x1x8x128xbf16> to vector<8x128xbf16>
    %202 = arith.extf %201 : vector<8x128xbf16> to vector<8x128xf32>
    %cst_131 = arith.constant 0.000000e+00 : f32
    %203 = vector.broadcast %cst_131 : f32 to vector<8x128xf32>
    %204 = arith.maximumf %202, %203 : vector<8x128xf32>
    %205 = arith.addf %199, %204 : vector<8x128xf32>
    %c0_132 = arith.constant 0 : index
    %c33 = arith.constant 33 : index
    %c0_133 = arith.constant 0 : index
    %c0_134 = arith.constant 0 : index
    %206 = vector.load %arg2[%c0_132, %c33, %c0_133, %c0_134] : memref<1x49x8x128xbf16, #tpu.memory_space<vmem>>, vector<1x1x8x128xbf16>
    %207 = vector.shape_cast %206 : vector<1x1x8x128xbf16> to vector<8x128xbf16>
    %208 = arith.extf %207 : vector<8x128xbf16> to vector<8x128xf32>
    %cst_135 = arith.constant 0.000000e+00 : f32
    %209 = vector.broadcast %cst_135 : f32 to vector<8x128xf32>
    %210 = arith.maximumf %208, %209 : vector<8x128xf32>
    %211 = arith.addf %193, %210 : vector<8x128xf32>
    %c0_136 = arith.constant 0 : index
    %c34 = arith.constant 34 : index
    %c0_137 = arith.constant 0 : index
    %c0_138 = arith.constant 0 : index
    %212 = vector.load %arg2[%c0_136, %c34, %c0_137, %c0_138] : memref<1x49x8x128xbf16, #tpu.memory_space<vmem>>, vector<1x1x8x128xbf16>
    %213 = vector.shape_cast %212 : vector<1x1x8x128xbf16> to vector<8x128xbf16>
    %214 = arith.extf %213 : vector<8x128xbf16> to vector<8x128xf32>
    %cst_139 = arith.constant 0.000000e+00 : f32
    %215 = vector.broadcast %cst_139 : f32 to vector<8x128xf32>
    %216 = arith.maximumf %214, %215 : vector<8x128xf32>
    %217 = arith.addf %211, %216 : vector<8x128xf32>
    %218 = arith.addf %173, %205 : vector<8x128xf32>
    %219 = arith.addf %174, %217 : vector<8x128xf32>
    %220 = arith.addf %175, %205 : vector<8x128xf32>
    %221 = arith.addf %176, %217 : vector<8x128xf32>
    %c0_140 = arith.constant 0 : index
    %c37 = arith.constant 37 : index
    %c0_141 = arith.constant 0 : index
    %c0_142 = arith.constant 0 : index
    %222 = vector.load %arg2[%c0_140, %c37, %c0_141, %c0_142] : memref<1x49x8x128xbf16, #tpu.memory_space<vmem>>, vector<1x1x8x128xbf16>
    %223 = vector.shape_cast %222 : vector<1x1x8x128xbf16> to vector<8x128xbf16>
    %224 = arith.extf %223 : vector<8x128xbf16> to vector<8x128xf32>
    %cst_143 = arith.constant 0.000000e+00 : f32
    %225 = vector.broadcast %cst_143 : f32 to vector<8x128xf32>
    %226 = arith.maximumf %224, %225 : vector<8x128xf32>
    %c0_144 = arith.constant 0 : index
    %c38 = arith.constant 38 : index
    %c0_145 = arith.constant 0 : index
    %c0_146 = arith.constant 0 : index
    %227 = vector.load %arg2[%c0_144, %c38, %c0_145, %c0_146] : memref<1x49x8x128xbf16, #tpu.memory_space<vmem>>, vector<1x1x8x128xbf16>
    %228 = vector.shape_cast %227 : vector<1x1x8x128xbf16> to vector<8x128xbf16>
    %229 = arith.extf %228 : vector<8x128xbf16> to vector<8x128xf32>
    %cst_147 = arith.constant 0.000000e+00 : f32
    %230 = vector.broadcast %cst_147 : f32 to vector<8x128xf32>
    %231 = arith.maximumf %229, %230 : vector<8x128xf32>
    %232 = arith.addf %226, %231 : vector<8x128xf32>
    %c0_148 = arith.constant 0 : index
    %c39 = arith.constant 39 : index
    %c0_149 = arith.constant 0 : index
    %c0_150 = arith.constant 0 : index
    %233 = vector.load %arg2[%c0_148, %c39, %c0_149, %c0_150] : memref<1x49x8x128xbf16, #tpu.memory_space<vmem>>, vector<1x1x8x128xbf16>
    %234 = vector.shape_cast %233 : vector<1x1x8x128xbf16> to vector<8x128xbf16>
    %235 = arith.extf %234 : vector<8x128xbf16> to vector<8x128xf32>
    %cst_151 = arith.constant 0.000000e+00 : f32
    %236 = vector.broadcast %cst_151 : f32 to vector<8x128xf32>
    %237 = arith.maximumf %235, %236 : vector<8x128xf32>
    %238 = arith.addf %232, %237 : vector<8x128xf32>
    %c0_152 = arith.constant 0 : index
    %c35 = arith.constant 35 : index
    %c0_153 = arith.constant 0 : index
    %c0_154 = arith.constant 0 : index
    %239 = vector.load %arg2[%c0_152, %c35, %c0_153, %c0_154] : memref<1x49x8x128xbf16, #tpu.memory_space<vmem>>, vector<1x1x8x128xbf16>
    %240 = vector.shape_cast %239 : vector<1x1x8x128xbf16> to vector<8x128xbf16>
    %241 = arith.extf %240 : vector<8x128xbf16> to vector<8x128xf32>
    %cst_155 = arith.constant 0.000000e+00 : f32
    %242 = vector.broadcast %cst_155 : f32 to vector<8x128xf32>
    %243 = arith.maximumf %241, %242 : vector<8x128xf32>
    %244 = arith.addf %238, %243 : vector<8x128xf32>
    %c0_156 = arith.constant 0 : index
    %c36 = arith.constant 36 : index
    %c0_157 = arith.constant 0 : index
    %c0_158 = arith.constant 0 : index
    %245 = vector.load %arg2[%c0_156, %c36, %c0_157, %c0_158] : memref<1x49x8x128xbf16, #tpu.memory_space<vmem>>, vector<1x1x8x128xbf16>
    %246 = vector.shape_cast %245 : vector<1x1x8x128xbf16> to vector<8x128xbf16>
    %247 = arith.extf %246 : vector<8x128xbf16> to vector<8x128xf32>
    %cst_159 = arith.constant 0.000000e+00 : f32
    %248 = vector.broadcast %cst_159 : f32 to vector<8x128xf32>
    %249 = arith.maximumf %247, %248 : vector<8x128xf32>
    %250 = arith.addf %244, %249 : vector<8x128xf32>
    %c0_160 = arith.constant 0 : index
    %c40 = arith.constant 40 : index
    %c0_161 = arith.constant 0 : index
    %c0_162 = arith.constant 0 : index
    %251 = vector.load %arg2[%c0_160, %c40, %c0_161, %c0_162] : memref<1x49x8x128xbf16, #tpu.memory_space<vmem>>, vector<1x1x8x128xbf16>
    %252 = vector.shape_cast %251 : vector<1x1x8x128xbf16> to vector<8x128xbf16>
    %253 = arith.extf %252 : vector<8x128xbf16> to vector<8x128xf32>
    %cst_163 = arith.constant 0.000000e+00 : f32
    %254 = vector.broadcast %cst_163 : f32 to vector<8x128xf32>
    %255 = arith.maximumf %253, %254 : vector<8x128xf32>
    %256 = arith.addf %238, %255 : vector<8x128xf32>
    %c0_164 = arith.constant 0 : index
    %c41 = arith.constant 41 : index
    %c0_165 = arith.constant 0 : index
    %c0_166 = arith.constant 0 : index
    %257 = vector.load %arg2[%c0_164, %c41, %c0_165, %c0_166] : memref<1x49x8x128xbf16, #tpu.memory_space<vmem>>, vector<1x1x8x128xbf16>
    %258 = vector.shape_cast %257 : vector<1x1x8x128xbf16> to vector<8x128xbf16>
    %259 = arith.extf %258 : vector<8x128xbf16> to vector<8x128xf32>
    %cst_167 = arith.constant 0.000000e+00 : f32
    %260 = vector.broadcast %cst_167 : f32 to vector<8x128xf32>
    %261 = arith.maximumf %259, %260 : vector<8x128xf32>
    %262 = arith.addf %256, %261 : vector<8x128xf32>
    %263 = arith.addf %220, %250 : vector<8x128xf32>
    %264 = arith.addf %221, %262 : vector<8x128xf32>
    %c0_168 = arith.constant 0 : index
    %c44 = arith.constant 44 : index
    %c0_169 = arith.constant 0 : index
    %c0_170 = arith.constant 0 : index
    %265 = vector.load %arg2[%c0_168, %c44, %c0_169, %c0_170] : memref<1x49x8x128xbf16, #tpu.memory_space<vmem>>, vector<1x1x8x128xbf16>
    %266 = vector.shape_cast %265 : vector<1x1x8x128xbf16> to vector<8x128xbf16>
    %267 = arith.extf %266 : vector<8x128xbf16> to vector<8x128xf32>
    %cst_171 = arith.constant 0.000000e+00 : f32
    %268 = vector.broadcast %cst_171 : f32 to vector<8x128xf32>
    %269 = arith.maximumf %267, %268 : vector<8x128xf32>
    %c0_172 = arith.constant 0 : index
    %c45 = arith.constant 45 : index
    %c0_173 = arith.constant 0 : index
    %c0_174 = arith.constant 0 : index
    %270 = vector.load %arg2[%c0_172, %c45, %c0_173, %c0_174] : memref<1x49x8x128xbf16, #tpu.memory_space<vmem>>, vector<1x1x8x128xbf16>
    %271 = vector.shape_cast %270 : vector<1x1x8x128xbf16> to vector<8x128xbf16>
    %272 = arith.extf %271 : vector<8x128xbf16> to vector<8x128xf32>
    %cst_175 = arith.constant 0.000000e+00 : f32
    %273 = vector.broadcast %cst_175 : f32 to vector<8x128xf32>
    %274 = arith.maximumf %272, %273 : vector<8x128xf32>
    %275 = arith.addf %269, %274 : vector<8x128xf32>
    %c0_176 = arith.constant 0 : index
    %c46 = arith.constant 46 : index
    %c0_177 = arith.constant 0 : index
    %c0_178 = arith.constant 0 : index
    %276 = vector.load %arg2[%c0_176, %c46, %c0_177, %c0_178] : memref<1x49x8x128xbf16, #tpu.memory_space<vmem>>, vector<1x1x8x128xbf16>
    %277 = vector.shape_cast %276 : vector<1x1x8x128xbf16> to vector<8x128xbf16>
    %278 = arith.extf %277 : vector<8x128xbf16> to vector<8x128xf32>
    %cst_179 = arith.constant 0.000000e+00 : f32
    %279 = vector.broadcast %cst_179 : f32 to vector<8x128xf32>
    %280 = arith.maximumf %278, %279 : vector<8x128xf32>
    %281 = arith.addf %275, %280 : vector<8x128xf32>
    %c0_180 = arith.constant 0 : index
    %c42 = arith.constant 42 : index
    %c0_181 = arith.constant 0 : index
    %c0_182 = arith.constant 0 : index
    %282 = vector.load %arg2[%c0_180, %c42, %c0_181, %c0_182] : memref<1x49x8x128xbf16, #tpu.memory_space<vmem>>, vector<1x1x8x128xbf16>
    %283 = vector.shape_cast %282 : vector<1x1x8x128xbf16> to vector<8x128xbf16>
    %284 = arith.extf %283 : vector<8x128xbf16> to vector<8x128xf32>
    %cst_183 = arith.constant 0.000000e+00 : f32
    %285 = vector.broadcast %cst_183 : f32 to vector<8x128xf32>
    %286 = arith.maximumf %284, %285 : vector<8x128xf32>
    %287 = arith.addf %281, %286 : vector<8x128xf32>
    %c0_184 = arith.constant 0 : index
    %c43 = arith.constant 43 : index
    %c0_185 = arith.constant 0 : index
    %c0_186 = arith.constant 0 : index
    %288 = vector.load %arg2[%c0_184, %c43, %c0_185, %c0_186] : memref<1x49x8x128xbf16, #tpu.memory_space<vmem>>, vector<1x1x8x128xbf16>
    %289 = vector.shape_cast %288 : vector<1x1x8x128xbf16> to vector<8x128xbf16>
    %290 = arith.extf %289 : vector<8x128xbf16> to vector<8x128xf32>
    %cst_187 = arith.constant 0.000000e+00 : f32
    %291 = vector.broadcast %cst_187 : f32 to vector<8x128xf32>
    %292 = arith.maximumf %290, %291 : vector<8x128xf32>
    %293 = arith.addf %287, %292 : vector<8x128xf32>
    %c0_188 = arith.constant 0 : index
    %c47 = arith.constant 47 : index
    %c0_189 = arith.constant 0 : index
    %c0_190 = arith.constant 0 : index
    %294 = vector.load %arg2[%c0_188, %c47, %c0_189, %c0_190] : memref<1x49x8x128xbf16, #tpu.memory_space<vmem>>, vector<1x1x8x128xbf16>
    %295 = vector.shape_cast %294 : vector<1x1x8x128xbf16> to vector<8x128xbf16>
    %296 = arith.extf %295 : vector<8x128xbf16> to vector<8x128xf32>
    %cst_191 = arith.constant 0.000000e+00 : f32
    %297 = vector.broadcast %cst_191 : f32 to vector<8x128xf32>
    %298 = arith.maximumf %296, %297 : vector<8x128xf32>
    %299 = arith.addf %281, %298 : vector<8x128xf32>
    %c0_192 = arith.constant 0 : index
    %c48 = arith.constant 48 : index
    %c0_193 = arith.constant 0 : index
    %c0_194 = arith.constant 0 : index
    %300 = vector.load %arg2[%c0_192, %c48, %c0_193, %c0_194] : memref<1x49x8x128xbf16, #tpu.memory_space<vmem>>, vector<1x1x8x128xbf16>
    %301 = vector.shape_cast %300 : vector<1x1x8x128xbf16> to vector<8x128xbf16>
    %302 = arith.extf %301 : vector<8x128xbf16> to vector<8x128xf32>
    %cst_195 = arith.constant 0.000000e+00 : f32
    %303 = vector.broadcast %cst_195 : f32 to vector<8x128xf32>
    %304 = arith.maximumf %302, %303 : vector<8x128xf32>
    %305 = arith.addf %299, %304 : vector<8x128xf32>
    %306 = arith.addf %263, %293 : vector<8x128xf32>
    %307 = arith.addf %264, %305 : vector<8x128xf32>
    %c0_i32 = arith.constant 0 : i32
    %308 = arith.cmpi eq, %arg1, %c0_i32 : i32
    %309 = arith.extui %308 : i1 to i32
    %c0_i32_196 = arith.constant 0 : i32
    %310 = arith.cmpi ne, %309, %c0_i32_196 : i32
    scf.if %310 {
      %cst_218 = arith.constant 0.000000e+00 : f32
      %335 = vector.broadcast %cst_218 : f32 to vector<8x512xf32>
      %c0_219 = arith.constant 0 : index
      %c0_220 = arith.constant 0 : index
      %336 = vector.load %arg10[%c0_219, %c0_220] : memref<8x512xf32, #tpu.memory_space<vmem>>, vector<8x512xf32>
      tpu.vector_store %arg10[%c0_219, %c0_220], %335 {strides = array<i32>} : memref<8x512xf32, #tpu.memory_space<vmem>>, vector<8x512xf32>,
    } else {
    }
    %c0_197 = arith.constant 0 : index
    %c0_198 = arith.constant 0 : index
    %311 = vector.load %arg3[%c0_197, %c0_198] : memref<128x128xbf16, #tpu.memory_space<vmem>>, vector<128x128xbf16>
    %c0_199 = arith.constant 0 : index
    %c0_200 = arith.constant 0 : index
    %312 = vector.load %arg10[%c0_199, %c0_200] : memref<8x512xf32, #tpu.memory_space<vmem>>, vector<8x128xf32>
    %313 = arith.truncf %218 : vector<8x128xf32> to vector<8x128xbf16>
    %cst_201 = arith.constant dense<0.000000e+00> : vector<8x128xf32>
    %314 = tpu.matmul %313, %311, %cst_201 {dimension_numbers = #tpu.dot_dimension_numbers<[1], [0], [0], [1], [0, 0, 1, 1], [], []>} : vector<8x128xbf16>, vector<128x128xbf16>, vector<8x128xf32> -> vector<8x128xf32>
    %315 = arith.addf %312, %314 : vector<8x128xf32>
    %c0_202 = arith.constant 0 : index
    %c0_203 = arith.constant 0 : index
    %316 = vector.load %arg10[%c0_202, %c0_203] : memref<8x512xf32, #tpu.memory_space<vmem>>, vector<8x128xf32>
    tpu.vector_store %arg10[%c0_202, %c0_203], %315 {strides = array<i32>} : memref<8x512xf32, #tpu.memory_space<vmem>>, vector<8x128xf32>,
    %c0_204 = arith.constant 0 : index
    %c128 = arith.constant 128 : index
    %317 = vector.load %arg10[%c0_204, %c128] : memref<8x512xf32, #tpu.memory_space<vmem>>, vector<8x128xf32>
    %318 = arith.truncf %219 : vector<8x128xf32> to vector<8x128xbf16>
    %cst_205 = arith.constant dense<0.000000e+00> : vector<8x128xf32>
    %319 = tpu.matmul %318, %311, %cst_205 {dimension_numbers = #tpu.dot_dimension_numbers<[1], [0], [0], [1], [0, 0, 1, 1], [], []>} : vector<8x128xbf16>, vector<128x128xbf16>, vector<8x128xf32> -> vector<8x128xf32>
    %320 = arith.addf %317, %319 : vector<8x128xf32>
    %c0_206 = arith.constant 0 : index
    %c128_207 = arith.constant 128 : index
    %321 = vector.load %arg10[%c0_206, %c128_207] : memref<8x512xf32, #tpu.memory_space<vmem>>, vector<8x128xf32>
    tpu.vector_store %arg10[%c0_206, %c128_207], %320 {strides = array<i32>} : memref<8x512xf32, #tpu.memory_space<vmem>>, vector<8x128xf32>,
    %c0_208 = arith.constant 0 : index
    %c256 = arith.constant 256 : index
    %322 = vector.load %arg10[%c0_208, %c256] : memref<8x512xf32, #tpu.memory_space<vmem>>, vector<8x128xf32>
    %323 = arith.truncf %306 : vector<8x128xf32> to vector<8x128xbf16>
    %cst_209 = arith.constant dense<0.000000e+00> : vector<8x128xf32>
    %324 = tpu.matmul %323, %311, %cst_209 {dimension_numbers = #tpu.dot_dimension_numbers<[1], [0], [0], [1], [0, 0, 1, 1], [], []>} : vector<8x128xbf16>, vector<128x128xbf16>, vector<8x128xf32> -> vector<8x128xf32>
    %325 = arith.addf %322, %324 : vector<8x128xf32>
    %c0_210 = arith.constant 0 : index
    %c256_211 = arith.constant 256 : index
    %326 = vector.load %arg10[%c0_210, %c256_211] : memref<8x512xf32, #tpu.memory_space<vmem>>, vector<8x128xf32>
    tpu.vector_store %arg10[%c0_210, %c256_211], %325 {strides = array<i32>} : memref<8x512xf32, #tpu.memory_space<vmem>>, vector<8x128xf32>,
    %c0_212 = arith.constant 0 : index
    %c384 = arith.constant 384 : index
    %327 = vector.load %arg10[%c0_212, %c384] : memref<8x512xf32, #tpu.memory_space<vmem>>, vector<8x128xf32>
    %328 = arith.truncf %307 : vector<8x128xf32> to vector<8x128xbf16>
    %cst_213 = arith.constant dense<0.000000e+00> : vector<8x128xf32>
    %329 = tpu.matmul %328, %311, %cst_213 {dimension_numbers = #tpu.dot_dimension_numbers<[1], [0], [0], [1], [0, 0, 1, 1], [], []>} : vector<8x128xbf16>, vector<128x128xbf16>, vector<8x128xf32> -> vector<8x128xf32>
    %330 = arith.addf %327, %329 : vector<8x128xf32>
    %c0_214 = arith.constant 0 : index
    %c384_215 = arith.constant 384 : index
    %331 = vector.load %arg10[%c0_214, %c384_215] : memref<8x512xf32, #tpu.memory_space<vmem>>, vector<8x128xf32>
    tpu.vector_store %arg10[%c0_214, %c384_215], %330 {strides = array<i32>} : memref<8x512xf32, #tpu.memory_space<vmem>>, vector<8x128xf32>,
    %c0_i32_216 = arith.constant 0 : i32
    %332 = arith.cmpi eq, %arg1, %c0_i32_216 : i32
    %333 = arith.extui %332 : i1 to i32
    %c0_i32_217 = arith.constant 0 : i32
    %334 = arith.cmpi ne, %333, %c0_i32_217 : i32
    scf.if %334 {
      %c0_218 = arith.constant 0 : index
      %c0_219 = arith.constant 0 : index
      %335 = vector.load %arg10[%c0_218, %c0_219] : memref<8x512xf32, #tpu.memory_space<vmem>>, vector<8x512xf32>
      %c0_220 = arith.constant 0 : index
      %c0_221 = arith.constant 0 : index
      %336 = vector.load %arg4[%c0_220, %c0_221] : memref<1x512xf32, #tpu.memory_space<vmem>>, vector<1x512xf32>
      %337 = vector.broadcast %336 : vector<1x512xf32> to vector<8x512xf32>
      %338 = arith.addf %335, %337 : vector<8x512xf32>
      %cst_222 = arith.constant 0.000000e+00 : f32
      %339 = vector.broadcast %cst_222 : f32 to vector<8x512xf32>
      %340 = arith.maximumf %338, %339 : vector<8x512xf32>
      %341 = arith.truncf %340 : vector<8x512xf32> to vector<8x512xbf16>
      %c0_223 = arith.constant 0 : index
      %c0_224 = arith.constant 0 : index
      %342 = vector.load %arg5[%c0_223, %c0_224] : memref<512x768xbf16, #tpu.memory_space<vmem>>, vector<512x768xbf16>
      %cst_225 = arith.constant dense<0.000000e+00> : vector<8x768xf32>
      %343 = tpu.matmul %341, %342, %cst_225 {dimension_numbers = #tpu.dot_dimension_numbers<[1], [0], [0], [1], [0, 0, 1, 1], [], []>} : vector<8x512xbf16>, vector<512x768xbf16>, vector<8x768xf32> -> vector<8x768xf32>
      %c0_226 = arith.constant 0 : index
      %c0_227 = arith.constant 0 : index
      %344 = vector.load %arg6[%c0_226, %c0_227] : memref<1x768xf32, #tpu.memory_space<vmem>>, vector<1x768xf32>
      %345 = vector.broadcast %344 : vector<1x768xf32> to vector<8x768xf32>
      %346 = arith.addf %343, %345 : vector<8x768xf32>
      %cst_228 = arith.constant 0.000000e+00 : f32
      %347 = vector.broadcast %cst_228 : f32 to vector<8x768xf32>
      %348 = arith.maximumf %346, %347 : vector<8x768xf32>
      %349 = arith.truncf %348 : vector<8x768xf32> to vector<8x768xbf16>
      %c0_229 = arith.constant 0 : index
      %c0_230 = arith.constant 0 : index
      %350 = vector.load %arg7[%c0_229, %c0_230] : memref<768x128xbf16, #tpu.memory_space<vmem>>, vector<768x128xbf16>
      %cst_231 = arith.constant dense<0.000000e+00> : vector<8x128xf32>
      %351 = tpu.matmul %349, %350, %cst_231 {dimension_numbers = #tpu.dot_dimension_numbers<[1], [0], [0], [1], [0, 0, 1, 1], [], []>} : vector<8x768xbf16>, vector<768x128xbf16>, vector<8x128xf32> -> vector<8x128xf32>
      %c0_232 = arith.constant 0 : index
      %c0_233 = arith.constant 0 : index
      %352 = vector.load %arg8[%c0_232, %c0_233] : memref<1x128xf32, #tpu.memory_space<vmem>>, vector<1x128xf32>
      %353 = vector.broadcast %352 : vector<1x128xf32> to vector<8x128xf32>
      %354 = arith.addf %351, %353 : vector<8x128xf32>
      %c0_234 = arith.constant 0 : index
      %c0_235 = arith.constant 0 : index
      %355 = vector.load %arg9[%c0_234, %c0_235] : memref<8x128xf32, #tpu.memory_space<vmem>>, vector<8x128xf32>
      tpu.vector_store %arg9[%c0_234, %c0_235], %354 {strides = array<i32>} : memref<8x128xf32, #tpu.memory_space<vmem>>, vector<8x128xf32>,
    } else {
    }
    return
  }
  func.func @transform_0(%arg0: i32, %arg1: i32) -> (i32, i32, i32, i32) {
    %c0_i32 = arith.constant 0 : i32
    %c0_i32_0 = arith.constant 0 : i32
    %c0_i32_1 = arith.constant 0 : i32
    return %arg1, %c0_i32, %arg0, %c0_i32_0 : i32, i32, i32, i32
  }
  func.func @transform_1(%arg0: i32, %arg1: i32) -> (i32, i32) {
    %c0_i32 = arith.constant 0 : i32
    %c0_i32_0 = arith.constant 0 : i32
    return %arg1, %c0_i32 : i32, i32
  }
  func.func @transform_2(%arg0: i32, %arg1: i32) -> (i32, i32) {
    %c0_i32 = arith.constant 0 : i32
    %c0_i32_0 = arith.constant 0 : i32
    %c0_i32_1 = arith.constant 0 : i32
    return %c0_i32, %c0_i32_0 : i32, i32
  }
  func.func @transform_3(%arg0: i32, %arg1: i32) -> (i32, i32) {
    %c0_i32 = arith.constant 0 : i32
    %c0_i32_0 = arith.constant 0 : i32
    %c0_i32_1 = arith.constant 0 : i32
    return %c0_i32, %c0_i32_0 : i32, i32
  }
  func.func @transform_4(%arg0: i32, %arg1: i32) -> (i32, i32) {
    %c0_i32 = arith.constant 0 : i32
    %c0_i32_0 = arith.constant 0 : i32
    %c0_i32_1 = arith.constant 0 : i32
    return %c0_i32, %c0_i32_0 : i32, i32
  }
  func.func @transform_5(%arg0: i32, %arg1: i32) -> (i32, i32) {
    %c0_i32 = arith.constant 0 : i32
    %c0_i32_0 = arith.constant 0 : i32
    %c0_i32_1 = arith.constant 0 : i32
    return %c0_i32, %c0_i32_0 : i32, i32
  }
  func.func @transform_6(%arg0: i32, %arg1: i32) -> (i32, i32) {
    %c0_i32 = arith.constant 0 : i32
    %c0_i32_0 = arith.constant 0 : i32
    %c0_i32_1 = arith.constant 0 : i32
    return %c0_i32, %c0_i32_0 : i32, i32
  }
  func.func @transform_7(%arg0: i32, %arg1: i32) -> (i32, i32) {
    %c0_i32 = arith.constant 0 : i32
    %c0_i32_0 = arith.constant 0 : i32
    return %arg0, %c0_i32 : i32, i32
  }
}

</mosaic_0001>

<llo_original>
// kernel: tpu_custom_call.1
$region0: #{tpu_custom_call.1}
  #allocation0 [shape = 'u32[]', space=smem, size = 0x4, offset = 0x4, fixed_abs, tag = 'smem constant byte address 0x4 - core index']
  #allocation1 [shape = 'u32[72,128]{1,0:T(1,128)}', space=vmem, size = 0x9000, scoped, tag = 'internal scratch']
  #allocation2 [shape = 'f32[8,512]{1,0:T(8,128)}', space=vmem, size = 0x4000, scoped, tag = 'scratch operand']
  %s0 = inlined_call_operand.hbm [shape: bf16[1,49,8,128], index: 0, kind: input, shape index: {}]
  %s1 = inlined_call_operand.hbm [shape: bf16[128,128], index: 1, kind: input, shape index: {}]
  %s2 = inlined_call_operand.hbm [shape: f32[1,512], index: 2, kind: input, shape index: {}]
  %s3 = inlined_call_operand.hbm [shape: bf16[512,768], index: 3, kind: input, shape index: {}]
  %s4 = inlined_call_operand.hbm [shape: f32[1,768], index: 4, kind: input, shape index: {}]
  %s5 = inlined_call_operand.hbm [shape: bf16[768,128], index: 5, kind: input, shape index: {}]
  %s6 = inlined_call_operand.vmem [shape: f32[1,128], index: 6, kind: input, shape index: {}]
  %s7 = inlined_call_operand.hbm [shape: f32[8,128], index: 7, kind: output, shape index: {}]
  %s8 = sld [smem:[#allocation0]]
  $region70: #{tpu_custom_call.1} parent=0
    _
  %s10 = ssub.s32 1, %s8
  %s11 = scalar_select 0, %s10, %s8
  $region1: #{tpu_custom_call.1} parent=0
    #allocation3 [shape = 'u8[100352]{0}', space=vmem, size = 0x18800, scoped, tag = 'input window, operand 0, single buffered']
    #allocation4 [shape = 's32[1]{0}', space=sflag, size = 0x4, scoped, tag = 'scoped memory for tpu_custom_call.1']
    #allocation5 [shape = 's32[1]{0}', space=sflag, size = 0x4, scoped, tag = 'scoped memory for tpu_custom_call.1']
    #allocation6 [shape = 'u8[32768]{0}', space=vmem, size = 0x8000, scoped, tag = 'input window, operand 1, single buffered']
    #allocation7 [shape = 's32[1]{0}', space=sflag, size = 0x4, scoped, tag = 'scoped memory for tpu_custom_call.1']
    #allocation8 [shape = 'u8[2048]{0}', space=vmem, size = 0x800, scoped, tag = 'input window, operand 2, single buffered']
    #allocation9 [shape = 'u8[786432]{0}', space=vmem, size = 0xc0000, scoped, tag = 'input window, operand 3, single buffered']
    #allocation10 [shape = 's32[1]{0}', space=sflag, size = 0x4, scoped, tag = 'scoped memory for tpu_custom_call.1']
    #allocation11 [shape = 'u8[3072]{0}', space=vmem, size = 0xc00, scoped, tag = 'input window, operand 4, single buffered']
    #allocation12 [shape = 'u8[196608]{0}', space=vmem, size = 0x30000, scoped, tag = 'input window, operand 5, single buffered']
    #allocation13 [shape = 's32[1]{0}', space=sflag, size = 0x4, scoped, tag = 'scoped memory for tpu_custom_call.1']
    #allocation14 [shape = 'u8[4096]{0}', space=vmem, size = 0x1000, scoped, tag = 'output window, operand 0, single buffered']
    %12 = vsyncpa [#allocation4], 0
    %13 = vsyncpa [#allocation7], 0
    %14 = vsyncpa [#allocation10], 0
    %15 = vsyncpa [#allocation13], 0
    %16 = vsyncpa [#allocation5], 0
    // Predicated region
    $region2: #{tpu_custom_call.1} parent=1 // pred_check
      _
    $region3: #{tpu_custom_call.1} parent=1 // pred_check_branch
      %18 = sbr.rel (0) target = $region5
    $region4: #{tpu_custom_call.1} parent=1 // pred_region
      %20 = vsyncadd [#allocation4], 0
      %s21 = sshll.u32 %s0, 4
      %s22 = int_to_ptr.hbm [resolvable:$true] %s21
      %s23 = sshll.u32 [#allocation3], 4
      %s24 = int_to_ptr.vmem [resolvable:$true] %s23
      %29 = dma.hbm_to_vmem [thread:$0]  %s22, 3136, %s24, [#allocation4], 64, 64, 4
    $region5: #{tpu_custom_call.1} parent=1 // pred_fallthru
      _
    // Predicated region
    $region6: #{tpu_custom_call.1} parent=1 // pred_check
      _
    $region7: #{tpu_custom_call.1} parent=1 // pred_check_branch
      %31 = sbr.rel (0) target = $region9
    $region8: #{tpu_custom_call.1} parent=1 // pred_region
      %33 = vsyncadd [#allocation7], 0
      %s34 = sshll.u32 %s1, 4
      %s35 = int_to_ptr.hbm [resolvable:$true] %s34
      %s36 = sshll.u32 [#allocation6], 4
      %s37 = int_to_ptr.vmem [resolvable:$true] %s36
      %42 = dma.hbm_to_vmem [thread:$0]  %s35, 1024, %s37, [#allocation7], 64, 64, 4
    $region9: #{tpu_custom_call.1} parent=1 // pred_fallthru
      _
    // Predicated region
    $region10: #{tpu_custom_call.1} parent=1 // pred_check
      _
    $region11: #{tpu_custom_call.1} parent=1 // pred_check_branch
      %44 = sbr.rel (0) target = $region13
    $region12: #{tpu_custom_call.1} parent=1 // pred_region
      %46 = vsyncadd [#allocation7], 0
      %s48 = sshll.u32 %s2, 4
      %s49 = int_to_ptr.hbm [resolvable:$true] %s48
      %s50 = sshll.u32 [#allocation8], 4
      %s51 = int_to_ptr.vmem [resolvable:$true] %s50
      %53 = dma.hbm_to_vmem [thread:$0]  %s49, 64, %s51, [#allocation7]
    $region13: #{tpu_custom_call.1} parent=1 // pred_fallthru
      _
    // Predicated region
    $region14: #{tpu_custom_call.1} parent=1 // pred_check
      _
    $region15: #{tpu_custom_call.1} parent=1 // pred_check_branch
      %55 = sbr.rel (0) target = $region17
    $region16: #{tpu_custom_call.1} parent=1 // pred_region
      %57 = vsyncadd [#allocation10], 0
      %s58 = sshll.u32 %s3, 4
      %s59 = int_to_ptr.hbm [resolvable:$true] %s58
      %s60 = sshll.u32 [#allocation9], 4
      %s61 = int_to_ptr.vmem [resolvable:$true] %s60
      %66 = dma.hbm_to_vmem [thread:$0]  %s59, 24576, %s61, [#allocation10], 384, 384, 24
    $region17: #{tpu_custom_call.1} parent=1 // pred_fallthru
      _
    // Predicated region
    $region18: #{tpu_custom_call.1} parent=1 // pred_check
      _
    $region19: #{tpu_custom_call.1} parent=1 // pred_check_branch
      %68 = sbr.rel (0) target = $region21
    $region20: #{tpu_custom_call.1} parent=1 // pred_region
      %70 = vsyncadd [#allocation10], 0
      %s72 = sshll.u32 %s4, 4
      %s73 = int_to_ptr.hbm [resolvable:$true] %s72
      %s74 = sshll.u32 [#allocation11], 4
      %s75 = int_to_ptr.vmem [resolvable:$true] %s74
      %77 = dma.hbm_to_vmem [thread:$0]  %s73, 96, %s75, [#allocation10]
    $region21: #{tpu_custom_call.1} parent=1 // pred_fallthru
      _
    // Predicated region
    $region22: #{tpu_custom_call.1} parent=1 // pred_check
      _
    $region23: #{tpu_custom_call.1} parent=1 // pred_check_branch
      %79 = sbr.rel (0) target = $region25
    $region24: #{tpu_custom_call.1} parent=1 // pred_region
      %81 = vsyncadd [#allocation13], 0
      %s82 = sshll.u32 %s5, 4
      %s83 = int_to_ptr.hbm [resolvable:$true] %s82
      %s84 = sshll.u32 [#allocation12], 4
      %s85 = int_to_ptr.vmem [resolvable:$true] %s84
      %90 = dma.hbm_to_vmem [thread:$0]  %s83, 6144, %s85, [#allocation13], 64, 64, 4
    $region25: #{tpu_custom_call.1} parent=1 // pred_fallthru
      _
    // Predicated region
    $region26: #{tpu_custom_call.1} parent=1 // pred_check
      _
    $region27: #{tpu_custom_call.1} parent=1 // pred_check_branch
      %92 = sbr.rel (0) target = $region29
    $region28: #{tpu_custom_call.1} parent=1 // pred_region
      _
    $region29: #{tpu_custom_call.1} parent=1 // pred_fallthru
      _
    // Predicated region
    $region30: #{tpu_custom_call.1} parent=1 // pred_check
      _
    $region31: #{tpu_custom_call.1} parent=1 // pred_check_branch
      %94 = sbr.rel (0) target = $region33
    $region32: #{tpu_custom_call.1} parent=1 // pred_region
      %96 = dma.done [#allocation4], 3136
    $region33: #{tpu_custom_call.1} parent=1 // pred_fallthru
      _
    // Predicated region
    $region34: #{tpu_custom_call.1} parent=1 // pred_check
      _
    $region35: #{tpu_custom_call.1} parent=1 // pred_check_branch
      %98 = sbr.rel (0) target = $region37
    $region36: #{tpu_custom_call.1} parent=1 // pred_region
      %100 = dma.done [#allocation7], 1024
    $region37: #{tpu_custom_call.1} parent=1 // pred_fallthru
      _
    // Predicated region
    $region38: #{tpu_custom_call.1} parent=1 // pred_check
      _
    $region39: #{tpu_custom_call.1} parent=1 // pred_check_branch
      %102 = sbr.rel (0) target = $region41
    $region40: #{tpu_custom_call.1} parent=1 // pred_region
      %104 = dma.done [#allocation7], 64
    $region41: #{tpu_custom_call.1} parent=1 // pred_fallthru
      _
    // Predicated region
    $region42: #{tpu_custom_call.1} parent=1 // pred_check
      _
    $region43: #{tpu_custom_call.1} parent=1 // pred_check_branch
      %106 = sbr.rel (0) target = $region45
    $region44: #{tpu_custom_call.1} parent=1 // pred_region
      %108 = dma.done [#allocation10], 24576
    $region45: #{tpu_custom_call.1} parent=1 // pred_fallthru
      _
    // Predicated region
    $region46: #{tpu_custom_call.1} parent=1 // pred_check
      _
    $region47: #{tpu_custom_call.1} parent=1 // pred_check_branch
      %110 = sbr.rel (0) target = $region49
    $region48: #{tpu_custom_call.1} parent=1 // pred_region
      %112 = dma.done [#allocation10], 96
    $region49: #{tpu_custom_call.1} parent=1 // pred_fallthru
      _
    // Predicated region
    $region50: #{tpu_custom_call.1} parent=1 // pred_check
      _
    $region51: #{tpu_custom_call.1} parent=1 // pred_check_branch
      %114 = sbr.rel (0) target = $region53
    $region52: #{tpu_custom_call.1} parent=1 // pred_region
      %116 = dma.done [#allocation13], 6144
    $region53: #{tpu_custom_call.1} parent=1 // pred_fallthru
      _
    %s117 = scalar_lea.vmem [#allocation3], 8
    %v118 = vld [vmem:[%s117] sm:$0xf]
    %v119 = vunpack.c.l.bf16 %v118
    %v120 = vmax.f32 %v119, 0.0
    %s121 = scalar_lea.vmem [#allocation3], 12
    %v122 = vld [vmem:[%s121] sm:$0xf]
    %v123 = vunpack.c.l.bf16 %v122
    %v124 = vmax.f32 %v123, 0.0
    %v125 = vadd.f32 %v120, %v124
    %s126 = scalar_lea.vmem [#allocation3], 16
    %v127 = vld [vmem:[%s126] sm:$0xf]
    %v128 = vunpack.c.l.bf16 %v127
    %v129 = vmax.f32 %v128, 0.0
    %v130 = vadd.f32 %v125, %v129
    %v131 = vld [vmem:[#allocation3] sm:$0xf]
    %v132 = vunpack.c.l.bf16 %v131
    %v133 = vmax.f32 %v132, 0.0
    %v134 = vadd.f32 %v130, %v133
    %s135 = scalar_lea.vmem [#allocation3], 4
    %v136 = vld [vmem:[%s135] sm:$0xf]
    %v137 = vunpack.c.l.bf16 %v136
    %v138 = vmax.f32 %v137, 0.0
    %v139 = vadd.f32 %v134, %v138
    %s140 = scalar_lea.vmem [#allocation3], 20
    %v141 = vld [vmem:[%s140] sm:$0xf]
    %v142 = vunpack.c.l.bf16 %v141
    %v143 = vmax.f32 %v142, 0.0
    %v144 = vadd.f32 %v130, %v143
    %s145 = scalar_lea.vmem [#allocation3], 24
    %v146 = vld [vmem:[%s145] sm:$0xf]
    %v147 = vunpack.c.l.bf16 %v146
    %v148 = vmax.f32 %v147, 0.0
    %v149 = vadd.f32 %v144, %v148
    %v150 = vadd.f32 %v139, 0.0
    %v151 = vadd.f32 %v149, 0.0
    %s152 = scalar_lea.vmem [#allocation3], 36
    %v153 = vld [vmem:[%s152] sm:$0xf]
    %v154 = vunpack.c.l.bf16 %v153
    %v155 = vmax.f32 %v154, 0.0
    %s156 = scalar_lea.vmem [#allocation3], 40
    %v157 = vld [vmem:[%s156] sm:$0xf]
    %v158 = vunpack.c.l.bf16 %v157
    %v159 = vmax.f32 %v158, 0.0
    %v160 = vadd.f32 %v155, %v159
    %s161 = scalar_lea.vmem [#allocation3], 44
    %v162 = vld [vmem:[%s161] sm:$0xf]
    %v163 = vunpack.c.l.bf16 %v162
    %v164 = vmax.f32 %v163, 0.0
    %v165 = vadd.f32 %v160, %v164
    %s166 = scalar_lea.vmem [#allocation3], 28
    %v167 = vld [vmem:[%s166] sm:$0xf]
    %v168 = vunpack.c.l.bf16 %v167
    %v169 = vmax.f32 %v168, 0.0
    %v170 = vadd.f32 %v165, %v169
    %s171 = scalar_lea.vmem [#allocation3], 32
    %v172 = vld [vmem:[%s171] sm:$0xf]
    %v173 = vunpack.c.l.bf16 %v172
    %v174 = vmax.f32 %v173, 0.0
    %v175 = vadd.f32 %v170, %v174
    %s176 = scalar_lea.vmem [#allocation3], 48
    %v177 = vld [vmem:[%s176] sm:$0xf]
    %v178 = vunpack.c.l.bf16 %v177
    %v179 = vmax.f32 %v178, 0.0
    %v180 = vadd.f32 %v165, %v179
    %s181 = scalar_lea.vmem [#allocation3], 52
    %v182 = vld [vmem:[%s181] sm:$0xf]
    %v183 = vunpack.c.l.bf16 %v182
    %v184 = vmax.f32 %v183, 0.0
    %v185 = vadd.f32 %v180, %v184
    %v186 = vadd.f32 %v150, %v175
    %v187 = vadd.f32 %v151, %v185
    %s188 = scalar_lea.vmem [#allocation3], 64
    %v189 = vld [vmem:[%s188] sm:$0xf]
    %v190 = vunpack.c.l.bf16 %v189
    %v191 = vmax.f32 %v190, 0.0
    %s192 = scalar_lea.vmem [#allocation3], 68
    %v193 = vld [vmem:[%s192] sm:$0xf]
    %v194 = vunpack.c.l.bf16 %v193
    %v195 = vmax.f32 %v194, 0.0
    %v196 = vadd.f32 %v191, %v195
    %s197 = scalar_lea.vmem [#allocation3], 72
    %v198 = vld [vmem:[%s197] sm:$0xf]
    %v199 = vunpack.c.l.bf16 %v198
    %v200 = vmax.f32 %v199, 0.0
    %v201 = vadd.f32 %v196, %v200
    %s202 = scalar_lea.vmem [#allocation3], 56
    %v203 = vld [vmem:[%s202] sm:$0xf]
    %v204 = vunpack.c.l.bf16 %v203
    %v205 = vmax.f32 %v204, 0.0
    %v206 = vadd.f32 %v201, %v205
    %s207 = scalar_lea.vmem [#allocation3], 60
    %v208 = vld [vmem:[%s207] sm:$0xf]
    %v209 = vunpack.c.l.bf16 %v208
    %v210 = vmax.f32 %v209, 0.0
    %v211 = vadd.f32 %v206, %v210
    %s212 = scalar_lea.vmem [#allocation3], 76
    %v213 = vld [vmem:[%s212] sm:$0xf]
    %v214 = vunpack.c.l.bf16 %v213
    %v215 = vmax.f32 %v214, 0.0
    %v216 = vadd.f32 %v201, %v215
    %s217 = scalar_lea.vmem [#allocation3], 80
    %v218 = vld [vmem:[%s217] sm:$0xf]
    %v219 = vunpack.c.l.bf16 %v218
    %v220 = vmax.f32 %v219, 0.0
    %v221 = vadd.f32 %v216, %v220
    %v222 = vadd.f32 %v186, %v211
    %v223 = vadd.f32 %v187, %v221
    %v224 = vadd.f32 %v211, 0.0
    %v225 = vadd.f32 %v221, 0.0
    %s226 = scalar_lea.vmem [#allocation3], 92
    %v227 = vld [vmem:[%s226] sm:$0xf]
    %v228 = vunpack.c.l.bf16 %v227
    %v229 = vmax.f32 %v228, 0.0
    %s230 = scalar_lea.vmem [#allocation3], 96
    %v231 = vld [vmem:[%s230] sm:$0xf]
    %v232 = vunpack.c.l.bf16 %v231
    %v233 = vmax.f32 %v232, 0.0
    %v234 = vadd.f32 %v229, %v233
    %s235 = scalar_lea.vmem [#allocation3], 100
    %v236 = vld [vmem:[%s235] sm:$0xf]
    %v237 = vunpack.c.l.bf16 %v236
    %v238 = vmax.f32 %v237, 0.0
    %v239 = vadd.f32 %v234, %v238
    %s240 = scalar_lea.vmem [#allocation3], 84
    %v241 = vld [vmem:[%s240] sm:$0xf]
    %v242 = vunpack.c.l.bf16 %v241
    %v243 = vmax.f32 %v242, 0.0
    %v244 = vadd.f32 %v239, %v243
    %s245 = scalar_lea.vmem [#allocation3], 88
    %v246 = vld [vmem:[%s245] sm:$0xf]
    %v247 = vunpack.c.l.bf16 %v246
    %v248 = vmax.f32 %v247, 0.0
    %v249 = vadd.f32 %v244, %v248
    %s250 = scalar_lea.vmem [#allocation3], 104
    %v251 = vld [vmem:[%s250] sm:$0xf]
    %v252 = vunpack.c.l.bf16 %v251
    %v253 = vmax.f32 %v252, 0.0
    %v254 = vadd.f32 %v239, %v253
    %s255 = scalar_lea.vmem [#allocation3], 108
    %v256 = vld [vmem:[%s255] sm:$0xf]
    %v257 = vunpack.c.l.bf16 %v256
    %v258 = vmax.f32 %v257, 0.0
    %v259 = vadd.f32 %v254, %v258
    %v260 = vadd.f32 %v222, %v249
    %v261 = vadd.f32 %v223, %v259
    %v262 = vadd.f32 %v224, %v249
    %v263 = vadd.f32 %v225, %v259
    %s264 = scalar_lea.vmem [#allocation3], 120
    %v265 = vld [vmem:[%s264] sm:$0xf]
    %v266 = vunpack.c.l.bf16 %v265
    %v267 = vmax.f32 %v266, 0.0
    %s268 = scalar_lea.vmem [#allocation3], 124
    %v269 = vld [vmem:[%s268] sm:$0xf]
    %v270 = vunpack.c.l.bf16 %v269
    %v271 = vmax.f32 %v270, 0.0
    %v272 = vadd.f32 %v267, %v271
    %s273 = scalar_lea.vmem [#allocation3], 128
    %v274 = vld [vmem:[%s273] sm:$0xf]
    %v275 = vunpack.c.l.bf16 %v274
    %v276 = vmax.f32 %v275, 0.0
    %v277 = vadd.f32 %v272, %v276
    %s278 = scalar_lea.vmem [#allocation3], 112
    %v279 = vld [vmem:[%s278] sm:$0xf]
    %v280 = vunpack.c.l.bf16 %v279
    %v281 = vmax.f32 %v280, 0.0
    %v282 = vadd.f32 %v277, %v281
    %s283 = scalar_lea.vmem [#allocation3], 116
    %v284 = vld [vmem:[%s283] sm:$0xf]
    %v285 = vunpack.c.l.bf16 %v284
    %v286 = vmax.f32 %v285, 0.0
    %v287 = vadd.f32 %v282, %v286
    %s288 = scalar_lea.vmem [#allocation3], 132
    %v289 = vld [vmem:[%s288] sm:$0xf]
    %v290 = vunpack.c.l.bf16 %v289
    %v291 = vmax.f32 %v290, 0.0
    %v292 = vadd.f32 %v277, %v291
    %s293 = scalar_lea.vmem [#allocation3], 136
    %v294 = vld [vmem:[%s293] sm:$0xf]
    %v295 = vunpack.c.l.bf16 %v294
    %v296 = vmax.f32 %v295, 0.0
    %v297 = vadd.f32 %v292, %v296
    %v298 = vadd.f32 %v260, %v287
    %v299 = vadd.f32 %v261, %v297
    %v300 = vadd.f32 %v262, %v287
    %v301 = vadd.f32 %v263, %v297
    %s302 = scalar_lea.vmem [#allocation3], 148
    %v303 = vld [vmem:[%s302] sm:$0xf]
    %v304 = vunpack.c.l.bf16 %v303
    %v305 = vmax.f32 %v304, 0.0
    %s306 = scalar_lea.vmem [#allocation3], 152
    %v307 = vld [vmem:[%s306] sm:$0xf]
    %v308 = vunpack.c.l.bf16 %v307
    %v309 = vmax.f32 %v308, 0.0
    %v310 = vadd.f32 %v305, %v309
    %s311 = scalar_lea.vmem [#allocation3], 156
    %v312 = vld [vmem:[%s311] sm:$0xf]
    %v313 = vunpack.c.l.bf16 %v312
    %v314 = vmax.f32 %v313, 0.0
    %v315 = vadd.f32 %v310, %v314
    %s316 = scalar_lea.vmem [#allocation3], 140
    %v317 = vld [vmem:[%s316] sm:$0xf]
    %v318 = vunpack.c.l.bf16 %v317
    %v319 = vmax.f32 %v318, 0.0
    %v320 = vadd.f32 %v315, %v319
    %s321 = scalar_lea.vmem [#allocation3], 144
    %v322 = vld [vmem:[%s321] sm:$0xf]
    %v323 = vunpack.c.l.bf16 %v322
    %v324 = vmax.f32 %v323, 0.0
    %v325 = vadd.f32 %v320, %v324
    %s326 = scalar_lea.vmem [#allocation3], 160
    %v327 = vld [vmem:[%s326] sm:$0xf]
    %v328 = vunpack.c.l.bf16 %v327
    %v329 = vmax.f32 %v328, 0.0
    %v330 = vadd.f32 %v315, %v329
    %s331 = scalar_lea.vmem [#allocation3], 164
    %v332 = vld [vmem:[%s331] sm:$0xf]
    %v333 = vunpack.c.l.bf16 %v332
    %v334 = vmax.f32 %v333, 0.0
    %v335 = vadd.f32 %v330, %v334
    %v336 = vadd.f32 %v300, %v325
    %v337 = vadd.f32 %v301, %v335
    %s338 = scalar_lea.vmem [#allocation3], 176
    %v339 = vld [vmem:[%s338] sm:$0xf]
    %v340 = vunpack.c.l.bf16 %v339
    %v341 = vmax.f32 %v340, 0.0
    %s342 = scalar_lea.vmem [#allocation3], 180
    %v343 = vld [vmem:[%s342] sm:$0xf]
    %v344 = vunpack.c.l.bf16 %v343
    %v345 = vmax.f32 %v344, 0.0
    %v346 = vadd.f32 %v341, %v345
    %s347 = scalar_lea.vmem [#allocation3], 184
    %v348 = vld [vmem:[%s347] sm:$0xf]
    %v349 = vunpack.c.l.bf16 %v348
    %v350 = vmax.f32 %v349, 0.0
    %v351 = vadd.f32 %v346, %v350
    %s352 = scalar_lea.vmem [#allocation3], 168
    %v353 = vld [vmem:[%s352] sm:$0xf]
    %v354 = vunpack.c.l.bf16 %v353
    %v355 = vmax.f32 %v354, 0.0
    %v356 = vadd.f32 %v351, %v355
    %s357 = scalar_lea.vmem [#allocation3], 172
    %v358 = vld [vmem:[%s357] sm:$0xf]
    %v359 = vunpack.c.l.bf16 %v358
    %v360 = vmax.f32 %v359, 0.0
    %v361 = vadd.f32 %v356, %v360
    %s362 = scalar_lea.vmem [#allocation3], 188
    %v363 = vld [vmem:[%s362] sm:$0xf]
    %v364 = vunpack.c.l.bf16 %v363
    %v365 = vmax.f32 %v364, 0.0
    %v366 = vadd.f32 %v351, %v365
    %s367 = scalar_lea.vmem [#allocation3], 192
    %v368 = vld [vmem:[%s367] sm:$0xf]
    %v369 = vunpack.c.l.bf16 %v368
    %v370 = vmax.f32 %v369, 0.0
    %v371 = vadd.f32 %v366, %v370
    %v372 = vadd.f32 %v336, %v361
    %v373 = vadd.f32 %v337, %v371
    %p374 = scmp.eq.s32.totalorder 0, 0
    // Predicated region
    $region54: #{tpu_custom_call.1} parent=1 // pred_check
      %p375 = pneg %p374
    $region55: #{tpu_custom_call.1} parent=1 // pred_check_branch
      %377 = sbr.rel (%p375) target = $region57
    $region56: #{tpu_custom_call.1} parent=1 // pred_region
      %378 = vst [vmem:[#allocation2] sm:$0xff] 0.0
      %379 = vst [vmem:[#allocation2 + $0x8] sm:$0xff] 0.0
      %380 = vst [vmem:[#allocation2 + $0x10] sm:$0xff] 0.0
      %381 = vst [vmem:[#allocation2 + $0x18] sm:$0xff] 0.0
    $region57: #{tpu_custom_call.1} parent=1 // pred_fallthru
      _
    %v382 = vld [vmem:[#allocation6] sm:$0xf]
    %v383 = vld [vmem:[#allocation6 + $0x4] sm:$0xf]
    %v384 = vld [vmem:[#allocation6 + $0x8] sm:$0xf]
    %v385 = vld [vmem:[#allocation6 + $0xc] sm:$0xf]
    %v386 = vld [vmem:[#allocation6 + $0x10] sm:$0xf]
    %v387 = vld [vmem:[#allocation6 + $0x14] sm:$0xf]
    %v388 = vld [vmem:[#allocation6 + $0x18] sm:$0xf]
    %v389 = vld [vmem:[#allocation6 + $0x1c] sm:$0xf]
    %v390 = vld [vmem:[#allocation6 + $0x20] sm:$0xf]
    %v391 = vld [vmem:[#allocation6 + $0x24] sm:$0xf]
    %v392 = vld [vmem:[#allocation6 + $0x28] sm:$0xf]
    %v393 = vld [vmem:[#allocation6 + $0x2c] sm:$0xf]
    %v394 = vld [vmem:[#allocation6 + $0x30] sm:$0xf]
    %v395 = vld [vmem:[#allocation6 + $0x34] sm:$0xf]
    %v396 = vld [vmem:[#allocation6 + $0x38] sm:$0xf]
    %v397 = vld [vmem:[#allocation6 + $0x3c] sm:$0xf]
    %v398 = vld [vmem:[#allocation2] sm:$0xff]
    %v399 = vpack.c.bf16 %v298, %v298
    %v416 = vunpack.c.l.b16 %v382
    %v417 = vunpack.c.l.b16 %v383
    %v418 = vunpack.c.l.b16 %v384
    %v419 = vunpack.c.l.b16 %v385
    %v420 = vunpack.c.l.b16 %v386
    %v421 = vunpack.c.l.b16 %v387
    %v422 = vunpack.c.l.b16 %v388
    %v423 = vunpack.c.l.b16 %v389
    %v424 = vunpack.c.l.b16 %v390
    %v425 = vunpack.c.l.b16 %v391
    %v426 = vunpack.c.l.b16 %v392
    %v427 = vunpack.c.l.b16 %v393
    %v428 = vunpack.c.l.b16 %v394
    %v429 = vunpack.c.l.b16 %v395
    %v430 = vunpack.c.l.b16 %v396
    %v431 = vunpack.c.l.b16 %v397
    %v432 = vpack.c.b16 %v417, %v416
    %v433 = vpack.c.b16 %v419, %v418
    %v434 = vpack.c.b16 %v421, %v420
    %v435 = vpack.c.b16 %v423, %v422
    %v436 = vpack.c.b16 %v425, %v424
    %v437 = vpack.c.b16 %v427, %v426
    %v438 = vpack.c.b16 %v429, %v428
    %v439 = vpack.c.b16 %v431, %v430
    %448 = vmatpush.bf16.msra.mxu0 %v439
    %449 = vmatpush.bf16.msra.mxu0 %v438
    %450 = vmatpush.bf16.msra.mxu0 %v437
    %451 = vmatpush.bf16.msra.mxu0 %v436
    %452 = vmatpush.bf16.msra.mxu0 %v435
    %453 = vmatpush.bf16.msra.mxu0 %v434
    %454 = vmatpush.bf16.msra.mxu0 %v433
    %455 = vmatpush.bf16.msra.mxu0 %v432
    %456 = vmatmul.bf16.gmra.mxu0 %v399
    %v457 = vpop.f32.mrf.mxu0
    %v458 = vadd.f32 0.0, %v457
    %v459 = vpop.f32.mrf.mxu0
    %460 = vdwg.mxu0
    %v461 = vadd.f32 %v398, %v458
    %462 = vst [vmem:[#allocation2] sm:$0xff] %v461
    %v463 = vld [vmem:[#allocation2 + $0x8] sm:$0xff]
    %v464 = vpack.c.bf16 %v299, %v299
    %465 = vmatpush.bf16.msra.mxu0 %v439
    %466 = vmatpush.bf16.msra.mxu0 %v438
    %467 = vmatpush.bf16.msra.mxu0 %v437
    %468 = vmatpush.bf16.msra.mxu0 %v436
    %469 = vmatpush.bf16.msra.mxu0 %v435
    %470 = vmatpush.bf16.msra.mxu0 %v434
    %471 = vmatpush.bf16.msra.mxu0 %v433
    %472 = vmatpush.bf16.msra.mxu0 %v432
    %473 = vmatmul.bf16.gmra.mxu0 %v464
    %v474 = vpop.f32.mrf.mxu0
    %v475 = vadd.f32 0.0, %v474
    %v476 = vpop.f32.mrf.mxu0
    %477 = vdwg.mxu0
    %v478 = vadd.f32 %v463, %v475
    %479 = vst [vmem:[#allocation2 + $0x8] sm:$0xff] %v478
    %v480 = vld [vmem:[#allocation2 + $0x10] sm:$0xff]
    %v481 = vpack.c.bf16 %v372, %v372
    %482 = vmatpush.bf16.msra.mxu0 %v439
    %483 = vmatpush.bf16.msra.mxu0 %v438
    %484 = vmatpush.bf16.msra.mxu0 %v437
    %485 = vmatpush.bf16.msra.mxu0 %v436
    %486 = vmatpush.bf16.msra.mxu0 %v435
    %487 = vmatpush.bf16.msra.mxu0 %v434
    %488 = vmatpush.bf16.msra.mxu0 %v433
    %489 = vmatpush.bf16.msra.mxu0 %v432
    %490 = vmatmul.bf16.gmra.mxu0 %v481
    %v491 = vpop.f32.mrf.mxu0
    %v492 = vadd.f32 0.0, %v491
    %v493 = vpop.f32.mrf.mxu0
    %494 = vdwg.mxu0
    %v495 = vadd.f32 %v480, %v492
    %496 = vst [vmem:[#allocation2 + $0x10] sm:$0xff] %v495
    %v497 = vld [vmem:[#allocation2 + $0x18] sm:$0xff]
    %v498 = vpack.c.bf16 %v373, %v373
    %499 = vmatpush.bf16.msra.mxu0 %v439
    %500 = vmatpush.bf16.msra.mxu0 %v438
    %501 = vmatpush.bf16.msra.mxu0 %v437
    %502 = vmatpush.bf16.msra.mxu0 %v436
    %503 = vmatpush.bf16.msra.mxu0 %v435
    %504 = vmatpush.bf16.msra.mxu0 %v434
    %505 = vmatpush.bf16.msra.mxu0 %v433
    %506 = vmatpush.bf16.msra.mxu0 %v432
    %507 = vmatmul.bf16.gmra.mxu0 %v498
    %v508 = vpop.f32.mrf.mxu0
    %v509 = vadd.f32 0.0, %v508
    %v510 = vpop.f32.mrf.mxu0
    %511 = vdwg.mxu0
    %v512 = vadd.f32 %v497, %v509
    %513 = vst [vmem:[#allocation2 + $0x18] sm:$0xff] %v512
    // Predicated region
    $region58: #{tpu_custom_call.1} parent=1 // pred_check
      %p514 = pneg %p374
    $region59: #{tpu_custom_call.1} parent=1 // pred_check_branch
      %516 = sbr.rel (%p514) target = $region61
    $region60: #{tpu_custom_call.1} parent=1 // pred_region
      %v517 = vld [vmem:[#allocation2] sm:$0xff]
      %v518 = vld [vmem:[#allocation2 + $0x8] sm:$0xff]
      %v519 = vld [vmem:[#allocation2 + $0x10] sm:$0xff]
      %v520 = vld [vmem:[#allocation2 + $0x18] sm:$0xff]
      %v521 = vld [vmem:[#allocation8] sm:$0xf]
      %v523 = vperm.slane %v521, 0
      %v524 = vperm.slane %v521, 1
      %v525 = vperm.slane %v521, 2
      %v526 = vperm.slane %v521, 3
      %v531 = vadd.f32 %v517, %v523
      %v532 = vadd.f32 %v518, %v524
      %v533 = vadd.f32 %v519, %v525
      %v534 = vadd.f32 %v520, %v526
      %v535 = vmax.f32 %v531, 0.0
      %v536 = vmax.f32 %v532, 0.0
      %v537 = vmax.f32 %v533, 0.0
      %v538 = vmax.f32 %v534, 0.0
      %v539 = vpack.c.bf16 %v535, %v535
      %v540 = vpack.c.bf16 %v536, %v536
      %v541 = vpack.c.bf16 %v537, %v537
      %v542 = vpack.c.bf16 %v538, %v538
      %v543 = vld [vmem:[#allocation9] sm:$0xff]
      %v544 = vld [vmem:[#allocation9 + $0x8] sm:$0xff]
      %v545 = vld [vmem:[#allocation9 + $0x10] sm:$0xff]
      %v546 = vld [vmem:[#allocation9 + $0x18] sm:$0xff]
      %v547 = vld [vmem:[#allocation9 + $0x20] sm:$0xff]
      %v548 = vld [vmem:[#allocation9 + $0x28] sm:$0xff]
      %v549 = vld [vmem:[#allocation9 + $0x30] sm:$0xff]
      %v550 = vld [vmem:[#allocation9 + $0x38] sm:$0xff]
      %v551 = vld [vmem:[#allocation9 + $0x40] sm:$0xff]
      %v552 = vld [vmem:[#allocation9 + $0x48] sm:$0xff]
      %v553 = vld [vmem:[#allocation9 + $0x50] sm:$0xff]
      %v554 = vld [vmem:[#allocation9 + $0x58] sm:$0xff]
      %v555 = vld [vmem:[#allocation9 + $0x60] sm:$0xff]
      %v556 = vld [vmem:[#allocation9 + $0x68] sm:$0xff]
      %v557 = vld [vmem:[#allocation9 + $0x70] sm:$0xff]
      %v558 = vld [vmem:[#allocation9 + $0x78] sm:$0xff]
      %v559 = vld [vmem:[#allocation9 + $0x80] sm:$0xff]
      %v560 = vld [vmem:[#allocation9 + $0x88] sm:$0xff]
      %v561 = vld [vmem:[#allocation9 + $0x90] sm:$0xff]
      %v562 = vld [vmem:[#allocation9 + $0x98] sm:$0xff]
      %v563 = vld [vmem:[#allocation9 + $0xa0] sm:$0xff]
      %v564 = vld [vmem:[#allocation9 + $0xa8] sm:$0xff]
      %v565 = vld [vmem:[#allocation9 + $0xb0] sm:$0xff]
      %v566 = vld [vmem:[#allocation9 + $0xb8] sm:$0xff]
      %v567 = vld [vmem:[#allocation9 + $0xc0] sm:$0xff]
      %v568 = vld [vmem:[#allocation9 + $0xc8] sm:$0xff]
      %v569 = vld [vmem:[#allocation9 + $0xd0] sm:$0xff]
      %v570 = vld [vmem:[#allocation9 + $0xd8] sm:$0xff]
      %v571 = vld [vmem:[#allocation9 + $0xe0] sm:$0xff]
      %v572 = vld [vmem:[#allocation9 + $0xe8] sm:$0xff]
      %v573 = vld [vmem:[#allocation9 + $0xf0] sm:$0xff]
      %v574 = vld [vmem:[#allocation9 + $0xf8] sm:$0xff]
      %v575 = vld [vmem:[#allocation9 + $0x100] sm:$0xff]
      %v576 = vld [vmem:[#allocation9 + $0x108] sm:$0xff]
      %v577 = vld [vmem:[#allocation9 + $0x110] sm:$0xff]
      %v578 = vld [vmem:[#allocation9 + $0x118] sm:$0xff]
      %v579 = vld [vmem:[#allocation9 + $0x120] sm:$0xff]
      %v580 = vld [vmem:[#allocation9 + $0x128] sm:$0xff]
      %v581 = vld [vmem:[#allocation9 + $0x130] sm:$0xff]
      %v582 = vld [vmem:[#allocation9 + $0x138] sm:$0xff]
      %v583 = vld [vmem:[#allocation9 + $0x140] sm:$0xff]
      %v584 = vld [vmem:[#allocation9 + $0x148] sm:$0xff]
      %v585 = vld [vmem:[#allocation9 + $0x150] sm:$0xff]
      %v586 = vld [vmem:[#allocation9 + $0x158] sm:$0xff]
      %v587 = vld [vmem:[#allocation9 + $0x160] sm:$0xff]
      %v588 = vld [vmem:[#allocation9 + $0x168] sm:$0xff]
      %v589 = vld [vmem:[#allocation9 + $0x170] sm:$0xff]
      %v590 = vld [vmem:[#allocation9 + $0x178] sm:$0xff]
      %v591 = vld [vmem:[#allocation9 + $0x180] sm:$0xff]
      %v592 = vld [vmem:[#allocation9 + $0x188] sm:$0xff]
      %v593 = vld [vmem:[#allocation9 + $0x190] sm:$0xff]
      %v594 = vld [vmem:[#allocation9 + $0x198] sm:$0xff]
      %v595 = vld [vmem:[#allocation9 + $0x1a0] sm:$0xff]
      %v596 = vld [vmem:[#allocation9 + $0x1a8] sm:$0xff]
      %v597 = vld [vmem:[#allocation9 + $0x1b0] sm:$0xff]
      %v598 = vld [vmem:[#allocation9 + $0x1b8] sm:$0xff]
      %v599 = vld [vmem:[#allocation9 + $0x1c0] sm:$0xff]
      %v600 = vld [vmem:[#allocation9 + $0x1c8] sm:$0xff]
      %v601 = vld [vmem:[#allocation9 + $0x1d0] sm:$0xff]
      %v602 = vld [vmem:[#allocation9 + $0x1d8] sm:$0xff]
      %v603 = vld [vmem:[#allocation9 + $0x1e0] sm:$0xff]
      %v604 = vld [vmem:[#allocation9 + $0x1e8] sm:$0xff]
      %v605 = vld [vmem:[#allocation9 + $0x1f0] sm:$0xff]
      %v606 = vld [vmem:[#allocation9 + $0x1f8] sm:$0xff]
      %v607 = vld [vmem:[#allocation9 + $0x200] sm:$0xff]
      %v608 = vld [vmem:[#allocation9 + $0x208] sm:$0xff]
      %v609 = vld [vmem:[#allocation9 + $0x210] sm:$0xff]
      %v610 = vld [vmem:[#allocation9 + $0x218] sm:$0xff]
      %v611 = vld [vmem:[#allocation9 + $0x220] sm:$0xff]
      %v612 = vld [vmem:[#allocation9 + $0x228] sm:$0xff]
      %v613 = vld [vmem:[#allocation9 + $0x230] sm:$0xff]
      %v614 = vld [vmem:[#allocation9 + $0x238] sm:$0xff]
      %v615 = vld [vmem:[#allocation9 + $0x240] sm:$0xff]
      %v616 = vld [vmem:[#allocation9 + $0x248] sm:$0xff]
      %v617 = vld [vmem:[#allocation9 + $0x250] sm:$0xff]
      %v618 = vld [vmem:[#allocation9 + $0x258] sm:$0xff]
      %v619 = vld [vmem:[#allocation9 + $0x260] sm:$0xff]
      %v620 = vld [vmem:[#allocation9 + $0x268] sm:$0xff]
      %v621 = vld [vmem:[#allocation9 + $0x270] sm:$0xff]
      %v622 = vld [vmem:[#allocation9 + $0x278] sm:$0xff]
      %v623 = vld [vmem:[#allocation9 + $0x280] sm:$0xff]
      %v624 = vld [vmem:[#allocation9 + $0x288] sm:$0xff]
      %v625 = vld [vmem:[#allocation9 + $0x290] sm:$0xff]
      %v626 = vld [vmem:[#allocation9 + $0x298] sm:$0xff]
      %v627 = vld [vmem:[#allocation9 + $0x2a0] sm:$0xff]
      %v628 = vld [vmem:[#allocation9 + $0x2a8] sm:$0xff]
      %v629 = vld [vmem:[#allocation9 + $0x2b0] sm:$0xff]
      %v630 = vld [vmem:[#allocation9 + $0x2b8] sm:$0xff]
      %v631 = vld [vmem:[#allocation9 + $0x2c0] sm:$0xff]
      %v632 = vld [vmem:[#allocation9 + $0x2c8] sm:$0xff]
      %v633 = vld [vmem:[#allocation9 + $0x2d0] sm:$0xff]
      %v634 = vld [vmem:[#allocation9 + $0x2d8] sm:$0xff]
      %v635 = vld [vmem:[#allocation9 + $0x2e0] sm:$0xff]
      %v636 = vld [vmem:[#allocation9 + $0x2e8] sm:$0xff]
      %v637 = vld [vmem:[#allocation9 + $0x2f0] sm:$0xff]
      %v638 = vld [vmem:[#allocation9 + $0x2f8] sm:$0xff]
      %v639 = vld [vmem:[#allocation9 + $0x300] sm:$0xff]
      %v640 = vld [vmem:[#allocation9 + $0x308] sm:$0xff]
      %v641 = vld [vmem:[#allocation9 + $0x310] sm:$0xff]
      %v642 = vld [vmem:[#allocation9 + $0x318] sm:$0xff]
      %v643 = vld [vmem:[#allocation9 + $0x320] sm:$0xff]
      %v644 = vld [vmem:[#allocation9 + $0x328] sm:$0xff]
      %v645 = vld [vmem:[#allocation9 + $0x330] sm:$0xff]
      %v646 = vld [vmem:[#allocation9 + $0x338] sm:$0xff]
      %v647 = vld [vmem:[#allocation9 + $0x340] sm:$0xff]
      %v648 = vld [vmem:[#allocation9 + $0x348] sm:$0xff]
      %v649 = vld [vmem:[#allocation9 + $0x350] sm:$0xff]
      %v650 = vld [vmem:[#allocation9 + $0x358] sm:$0xff]
      %v651 = vld [vmem:[#allocation9 + $0x360] sm:$0xff]
      %v652 = vld [vmem:[#allocation9 + $0x368] sm:$0xff]
      %v653 = vld [vmem:[#allocation9 + $0x370] sm:$0xff]
      %v654 = vld [vmem:[#allocation9 + $0x378] sm:$0xff]
      %v655 = vld [vmem:[#allocation9 + $0x380] sm:$0xff]
      %v656 = vld [vmem:[#allocation9 + $0x388] sm:$0xff]
      %v657 = vld [vmem:[#allocation9 + $0x390] sm:$0xff]
      %v658 = vld [vmem:[#allocation9 + $0x398] sm:$0xff]
      %v659 = vld [vmem:[#allocation9 + $0x3a0] sm:$0xff]
      %v660 = vld [vmem:[#allocation9 + $0x3a8] sm:$0xff]
      %v661 = vld [vmem:[#allocation9 + $0x3b0] sm:$0xff]
      %v662 = vld [vmem:[#allocation9 + $0x3b8] sm:$0xff]
      %v663 = vld [vmem:[#allocation9 + $0x3c0] sm:$0xff]
      %v664 = vld [vmem:[#allocation9 + $0x3c8] sm:$0xff]
      %v665 = vld [vmem:[#allocation9 + $0x3d0] sm:$0xff]
      %v666 = vld [vmem:[#allocation9 + $0x3d8] sm:$0xff]
      %v667 = vld [vmem:[#allocation9 + $0x3e0] sm:$0xff]
      %v668 = vld [vmem:[#allocation9 + $0x3e8] sm:$0xff]
      %v669 = vld [vmem:[#allocation9 + $0x3f0] sm:$0xff]
      %v670 = vld [vmem:[#allocation9 + $0x3f8] sm:$0xff]
      %v671 = vld [vmem:[#allocation9 + $0x400] sm:$0xff]
      %v672 = vld [vmem:[#allocation9 + $0x408] sm:$0xff]
      %v673 = vld [vmem:[#allocation9 + $0x410] sm:$0xff]
      %v674 = vld [vmem:[#allocation9 + $0x418] sm:$0xff]
      %v675 = vld [vmem:[#allocation9 + $0x420] sm:$0xff]
      %v676 = vld [vmem:[#allocation9 + $0x428] sm:$0xff]
      %v677 = vld [vmem:[#allocation9 + $0x430] sm:$0xff]
      %v678 = vld [vmem:[#allocation9 + $0x438] sm:$0xff]
      %v679 = vld [vmem:[#allocation9 + $0x440] sm:$0xff]
      %v680 = vld [vmem:[#allocation9 + $0x448] sm:$0xff]
      %v681 = vld [vmem:[#allocation9 + $0x450] sm:$0xff]
      %v682 = vld [vmem:[#allocation9 + $0x458] sm:$0xff]
      %v683 = vld [vmem:[#allocation9 + $0x460] sm:$0xff]
      %v684 = vld [vmem:[#allocation9 + $0x468] sm:$0xff]
      %v685 = vld [vmem:[#allocation9 + $0x470] sm:$0xff]
      %v686 = vld [vmem:[#allocation9 + $0x478] sm:$0xff]
      %v687 = vld [vmem:[#allocation9 + $0x480] sm:$0xff]
      %v688 = vld [vmem:[#allocation9 + $0x488] sm:$0xff]
      %v689 = vld [vmem:[#allocation9 + $0x490] sm:$0xff]
      %v690 = vld [vmem:[#allocation9 + $0x498] sm:$0xff]
      %v691 = vld [vmem:[#allocation9 + $0x4a0] sm:$0xff]
      %v692 = vld [vmem:[#allocation9 + $0x4a8] sm:$0xff]
      %v693 = vld [vmem:[#allocation9 + $0x4b0] sm:$0xff]
      %v694 = vld [vmem:[#allocation9 + $0x4b8] sm:$0xff]
      %v695 = vld [vmem:[#allocation9 + $0x4c0] sm:$0xff]
      %v696 = vld [vmem:[#allocation9 + $0x4c8] sm:$0xff]
      %v697 = vld [vmem:[#allocation9 + $0x4d0] sm:$0xff]
      %v698 = vld [vmem:[#allocation9 + $0x4d8] sm:$0xff]
      %v699 = vld [vmem:[#allocation9 + $0x4e0] sm:$0xff]
      %v700 = vld [vmem:[#allocation9 + $0x4e8] sm:$0xff]
      %v701 = vld [vmem:[#allocation9 + $0x4f0] sm:$0xff]
      %v702 = vld [vmem:[#allocation9 + $0x4f8] sm:$0xff]
      %v703 = vld [vmem:[#allocation9 + $0x500] sm:$0xff]
      %v704 = vld [vmem:[#allocation9 + $0x508] sm:$0xff]
      %v705 = vld [vmem:[#allocation9 + $0x510] sm:$0xff]
      %v706 = vld [vmem:[#allocation9 + $0x518] sm:$0xff]
      %v707 = vld [vmem:[#allocation9 + $0x520] sm:$0xff]
      %v708 = vld [vmem:[#allocation9 + $0x528] sm:$0xff]
      %v709 = vld [vmem:[#allocation9 + $0x530] sm:$0xff]
      %v710 = vld [vmem:[#allocation9 + $0x538] sm:$0xff]
      %v711 = vld [vmem:[#allocation9 + $0x540] sm:$0xff]
      %v712 = vld [vmem:[#allocation9 + $0x548] sm:$0xff]
      %v713 = vld [vmem:[#allocation9 + $0x550] sm:$0xff]
      %v714 = vld [vmem:[#allocation9 + $0x558] sm:$0xff]
      %v715 = vld [vmem:[#allocation9 + $0x560] sm:$0xff]
      %v716 = vld [vmem:[#allocation9 + $0x568] sm:$0xff]
      %v717 = vld [vmem:[#allocation9 + $0x570] sm:$0xff]
      %v718 = vld [vmem:[#allocation9 + $0x578] sm:$0xff]
      %v719 = vld [vmem:[#allocation9 + $0x580] sm:$0xff]
      %v720 = vld [vmem:[#allocation9 + $0x588] sm:$0xff]
      %v721 = vld [vmem:[#allocation9 + $0x590] sm:$0xff]
      %v722 = vld [vmem:[#allocation9 + $0x598] sm:$0xff]
      %v723 = vld [vmem:[#allocation9 + $0x5a0] sm:$0xff]
      %v724 = vld [vmem:[#allocation9 + $0x5a8] sm:$0xff]
      %v725 = vld [vmem:[#allocation9 + $0x5b0] sm:$0xff]
      %v726 = vld [vmem:[#allocation9 + $0x5b8] sm:$0xff]
      %v727 = vld [vmem:[#allocation9 + $0x5c0] sm:$0xff]
      %v728 = vld [vmem:[#allocation9 + $0x5c8] sm:$0xff]
      %v729 = vld [vmem:[#allocation9 + $0x5d0] sm:$0xff]
      %v730 = vld [vmem:[#allocation9 + $0x5d8] sm:$0xff]
      %v731 = vld [vmem:[#allocation9 + $0x5e0] sm:$0xff]
      %v732 = vld [vmem:[#allocation9 + $0x5e8] sm:$0xff]
      %v733 = vld [vmem:[#allocation9 + $0x5f0] sm:$0xff]
      %v734 = vld [vmem:[#allocation9 + $0x5f8] sm:$0xff]
      %v735 = vld [vmem:[#allocation11] sm:$0x3f]
      %v737 = vperm.slane %v735, 0
      %v738 = vperm.slane %v735, 1
      %v739 = vperm.slane %v735, 2
      %v740 = vperm.slane %v735, 3
      %v741 = vperm.slane %v735, 4
      %v742 = vperm.slane %v735, 5
      %v941 = vunpack.c.l.b16 %v543
      %v942 = vunpack.c.h.b16 %v543
      %v943 = vunpack.c.l.b16 %v544
      %v944 = vunpack.c.h.b16 %v544
      %v945 = vunpack.c.l.b16 %v545
      %v946 = vunpack.c.h.b16 %v545
      %v947 = vunpack.c.l.b16 %v546
      %v948 = vunpack.c.h.b16 %v546
      %v949 = vunpack.c.l.b16 %v547
      %v950 = vunpack.c.h.b16 %v547
      %v951 = vunpack.c.l.b16 %v548
      %v952 = vunpack.c.h.b16 %v548
      %v953 = vunpack.c.l.b16 %v549
      %v954 = vunpack.c.h.b16 %v549
      %v955 = vunpack.c.l.b16 %v550
      %v956 = vunpack.c.h.b16 %v550
      %v957 = vunpack.c.l.b16 %v551
      %v958 = vunpack.c.h.b16 %v551
      %v959 = vunpack.c.l.b16 %v552
      %v960 = vunpack.c.h.b16 %v552
      %v961 = vunpack.c.l.b16 %v553
      %v962 = vunpack.c.h.b16 %v553
      %v963 = vunpack.c.l.b16 %v554
      %v964 = vunpack.c.h.b16 %v554
      %v965 = vunpack.c.l.b16 %v555
      %v966 = vunpack.c.h.b16 %v555
      %v967 = vunpack.c.l.b16 %v556
      %v968 = vunpack.c.h.b16 %v556
      %v969 = vunpack.c.l.b16 %v557
      %v970 = vunpack.c.h.b16 %v557
      %v971 = vunpack.c.l.b16 %v558
      %v972 = vunpack.c.h.b16 %v558
      %v973 = vunpack.c.l.b16 %v559
      %v974 = vunpack.c.h.b16 %v559
      %v975 = vunpack.c.l.b16 %v560
      %v976 = vunpack.c.h.b16 %v560
      %v977 = vunpack.c.l.b16 %v561
      %v978 = vunpack.c.h.b16 %v561
      %v979 = vunpack.c.l.b16 %v562
      %v980 = vunpack.c.h.b16 %v562
      %v981 = vunpack.c.l.b16 %v563
      %v982 = vunpack.c.h.b16 %v563
      %v983 = vunpack.c.l.b16 %v564
      %v984 = vunpack.c.h.b16 %v564
      %v985 = vunpack.c.l.b16 %v565
      %v986 = vunpack.c.h.b16 %v565
      %v987 = vunpack.c.l.b16 %v566
      %v988 = vunpack.c.h.b16 %v566
      %v989 = vunpack.c.l.b16 %v567
      %v990 = vunpack.c.h.b16 %v567
      %v991 = vunpack.c.l.b16 %v568
      %v992 = vunpack.c.h.b16 %v568
      %v993 = vunpack.c.l.b16 %v569
      %v994 = vunpack.c.h.b16 %v569
      %v995 = vunpack.c.l.b16 %v570
      %v996 = vunpack.c.h.b16 %v570
      %v997 = vunpack.c.l.b16 %v571
      %v998 = vunpack.c.h.b16 %v571
      %v999 = vunpack.c.l.b16 %v572
      %v1000 = vunpack.c.h.b16 %v572
      %v1001 = vunpack.c.l.b16 %v573
      %v1002 = vunpack.c.h.b16 %v573
      %v1003 = vunpack.c.l.b16 %v574
      %v1004 = vunpack.c.h.b16 %v574
      %v1005 = vunpack.c.l.b16 %v575
      %v1006 = vunpack.c.h.b16 %v575
      %v1007 = vunpack.c.l.b16 %v576
      %v1008 = vunpack.c.h.b16 %v576
      %v1009 = vunpack.c.l.b16 %v577
      %v1010 = vunpack.c.h.b16 %v577
      %v1011 = vunpack.c.l.b16 %v578
      %v1012 = vunpack.c.h.b16 %v578
      %v1013 = vunpack.c.l.b16 %v579
      %v1014 = vunpack.c.h.b16 %v579
      %v1015 = vunpack.c.l.b16 %v580
      %v1016 = vunpack.c.h.b16 %v580
      %v1017 = vunpack.c.l.b16 %v581
      %v1018 = vunpack.c.h.b16 %v581
      %v1019 = vunpack.c.l.b16 %v582
      %v1020 = vunpack.c.h.b16 %v582
      %v1021 = vunpack.c.l.b16 %v583
      %v1022 = vunpack.c.h.b16 %v583
      %v1023 = vunpack.c.l.b16 %v584
      %v1024 = vunpack.c.h.b16 %v584
      %v1025 = vunpack.c.l.b16 %v585
      %v1026 = vunpack.c.h.b16 %v585
      %v1027 = vunpack.c.l.b16 %v586
      %v1028 = vunpack.c.h.b16 %v586
      %v1029 = vunpack.c.l.b16 %v587
      %v1030 = vunpack.c.h.b16 %v587
      %v1031 = vunpack.c.l.b16 %v588
      %v1032 = vunpack.c.h.b16 %v588
      %v1033 = vunpack.c.l.b16 %v589
      %v1034 = vunpack.c.h.b16 %v589
      %v1035 = vunpack.c.l.b16 %v590
      %v1036 = vunpack.c.h.b16 %v590
      %v1037 = vunpack.c.l.b16 %v591
      %v1038 = vunpack.c.h.b16 %v591
      %v1039 = vunpack.c.l.b16 %v592
      %v1040 = vunpack.c.h.b16 %v592
      %v1041 = vunpack.c.l.b16 %v593
      %v1042 = vunpack.c.h.b16 %v593
      %v1043 = vunpack.c.l.b16 %v594
      %v1044 = vunpack.c.h.b16 %v594
      %v1045 = vunpack.c.l.b16 %v595
      %v1046 = vunpack.c.h.b16 %v595
      %v1047 = vunpack.c.l.b16 %v596
      %v1048 = vunpack.c.h.b16 %v596
      %v1049 = vunpack.c.l.b16 %v597
      %v1050 = vunpack.c.h.b16 %v597
      %v1051 = vunpack.c.l.b16 %v598
      %v1052 = vunpack.c.h.b16 %v598
      %v1053 = vunpack.c.l.b16 %v599
      %v1054 = vunpack.c.h.b16 %v599
      %v1055 = vunpack.c.l.b16 %v600
      %v1056 = vunpack.c.h.b16 %v600
      %v1057 = vunpack.c.l.b16 %v601
      %v1058 = vunpack.c.h.b16 %v601
      %v1059 = vunpack.c.l.b16 %v602
      %v1060 = vunpack.c.h.b16 %v602
      %v1061 = vunpack.c.l.b16 %v603
      %v1062 = vunpack.c.h.b16 %v603
      %v1063 = vunpack.c.l.b16 %v604
      %v1064 = vunpack.c.h.b16 %v604
      %v1065 = vunpack.c.l.b16 %v605
      %v1066 = vunpack.c.h.b16 %v605
      %v1067 = vunpack.c.l.b16 %v606
      %v1068 = vunpack.c.h.b16 %v606
      %v1069 = vunpack.c.l.b16 %v607
      %v1070 = vunpack.c.h.b16 %v607
      %v1071 = vunpack.c.l.b16 %v608
      %v1072 = vunpack.c.h.b16 %v608
      %v1073 = vunpack.c.l.b16 %v609
      %v1074 = vunpack.c.h.b16 %v609
      %v1075 = vunpack.c.l.b16 %v610
      %v1076 = vunpack.c.h.b16 %v610
      %v1077 = vunpack.c.l.b16 %v611
      %v1078 = vunpack.c.h.b16 %v611
      %v1079 = vunpack.c.l.b16 %v612
      %v1080 = vunpack.c.h.b16 %v612
      %v1081 = vunpack.c.l.b16 %v613
      %v1082 = vunpack.c.h.b16 %v613
      %v1083 = vunpack.c.l.b16 %v614
      %v1084 = vunpack.c.h.b16 %v614
      %v1085 = vunpack.c.l.b16 %v615
      %v1086 = vunpack.c.h.b16 %v615
      %v1087 = vunpack.c.l.b16 %v616
      %v1088 = vunpack.c.h.b16 %v616
      %v1089 = vunpack.c.l.b16 %v617
      %v1090 = vunpack.c.h.b16 %v617
      %v1091 = vunpack.c.l.b16 %v618
      %v1092 = vunpack.c.h.b16 %v618
      %v1093 = vunpack.c.l.b16 %v619
      %v1094 = vunpack.c.h.b16 %v619
      %v1095 = vunpack.c.l.b16 %v620
      %v1096 = vunpack.c.h.b16 %v620
      %v1097 = vunpack.c.l.b16 %v621
      %v1098 = vunpack.c.h.b16 %v621
      %v1099 = vunpack.c.l.b16 %v622
      %v1100 = vunpack.c.h.b16 %v622
      %v1101 = vunpack.c.l.b16 %v623
      %v1102 = vunpack.c.h.b16 %v623
      %v1103 = vunpack.c.l.b16 %v624
      %v1104 = vunpack.c.h.b16 %v624
      %v1105 = vunpack.c.l.b16 %v625
      %v1106 = vunpack.c.h.b16 %v625
      %v1107 = vunpack.c.l.b16 %v626
      %v1108 = vunpack.c.h.b16 %v626
      %v1109 = vunpack.c.l.b16 %v627
      %v1110 = vunpack.c.h.b16 %v627
      %v1111 = vunpack.c.l.b16 %v628
      %v1112 = vunpack.c.h.b16 %v628
      %v1113 = vunpack.c.l.b16 %v629
      %v1114 = vunpack.c.h.b16 %v629
      %v1115 = vunpack.c.l.b16 %v630
      %v1116 = vunpack.c.h.b16 %v630
      %v1117 = vunpack.c.l.b16 %v631
      %v1118 = vunpack.c.h.b16 %v631
      %v1119 = vunpack.c.l.b16 %v632
      %v1120 = vunpack.c.h.b16 %v632
      %v1121 = vunpack.c.l.b16 %v633
      %v1122 = vunpack.c.h.b16 %v633
      %v1123 = vunpack.c.l.b16 %v634
      %v1124 = vunpack.c.h.b16 %v634
      %v1125 = vunpack.c.l.b16 %v635
      %v1126 = vunpack.c.h.b16 %v635
      %v1127 = vunpack.c.l.b16 %v636
      %v1128 = vunpack.c.h.b16 %v636
      %v1129 = vunpack.c.l.b16 %v637
      %v1130 = vunpack.c.h.b16 %v637
      %v1131 = vunpack.c.l.b16 %v638
      %v1132 = vunpack.c.h.b16 %v638
      %v1133 = vunpack.c.l.b16 %v639
      %v1134 = vunpack.c.h.b16 %v639
      %v1135 = vunpack.c.l.b16 %v640
      %v1136 = vunpack.c.h.b16 %v640
      %v1137 = vunpack.c.l.b16 %v641
      %v1138 = vunpack.c.h.b16 %v641
      %v1139 = vunpack.c.l.b16 %v642
      %v1140 = vunpack.c.h.b16 %v642
      %v1141 = vunpack.c.l.b16 %v643
      %v1142 = vunpack.c.h.b16 %v643
      %v1143 = vunpack.c.l.b16 %v644
      %v1144 = vunpack.c.h.b16 %v644
      %v1145 = vunpack.c.l.b16 %v645
      %v1146 = vunpack.c.h.b16 %v645
      %v1147 = vunpack.c.l.b16 %v646
      %v1148 = vunpack.c.h.b16 %v646
      %v1149 = vunpack.c.l.b16 %v647
      %v1150 = vunpack.c.h.b16 %v647
      %v1151 = vunpack.c.l.b16 %v648
      %v1152 = vunpack.c.h.b16 %v648
      %v1153 = vunpack.c.l.b16 %v649
      %v1154 = vunpack.c.h.b16 %v649
      %v1155 = vunpack.c.l.b16 %v650
      %v1156 = vunpack.c.h.b16 %v650
      %v1157 = vunpack.c.l.b16 %v651
      %v1158 = vunpack.c.h.b16 %v651
      %v1159 = vunpack.c.l.b16 %v652
      %v1160 = vunpack.c.h.b16 %v652
      %v1161 = vunpack.c.l.b16 %v653
      %v1162 = vunpack.c.h.b16 %v653
      %v1163 = vunpack.c.l.b16 %v654
      %v1164 = vunpack.c.h.b16 %v654
      %v1165 = vunpack.c.l.b16 %v655
      %v1166 = vunpack.c.h.b16 %v655
      %v1167 = vunpack.c.l.b16 %v656
      %v1168 = vunpack.c.h.b16 %v656
      %v1169 = vunpack.c.l.b16 %v657
      %v1170 = vunpack.c.h.b16 %v657
      %v1171 = vunpack.c.l.b16 %v658
      %v1172 = vunpack.c.h.b16 %v658
      %v1173 = vunpack.c.l.b16 %v659
      %v1174 = vunpack.c.h.b16 %v659
      %v1175 = vunpack.c.l.b16 %v660
      %v1176 = vunpack.c.h.b16 %v660
      %v1177 = vunpack.c.l.b16 %v661
      %v1178 = vunpack.c.h.b16 %v661
      %v1179 = vunpack.c.l.b16 %v662
      %v1180 = vunpack.c.h.b16 %v662
      %v1181 = vunpack.c.l.b16 %v663
      %v1182 = vunpack.c.h.b16 %v663
      %v1183 = vunpack.c.l.b16 %v664
      %v1184 = vunpack.c.h.b16 %v664
      %v1185 = vunpack.c.l.b16 %v665
      %v1186 = vunpack.c.h.b16 %v665
      %v1187 = vunpack.c.l.b16 %v666
      %v1188 = vunpack.c.h.b16 %v666
      %v1189 = vunpack.c.l.b16 %v667
      %v1190 = vunpack.c.h.b16 %v667
      %v1191 = vunpack.c.l.b16 %v668
      %v1192 = vunpack.c.h.b16 %v668
      %v1193 = vunpack.c.l.b16 %v669
      %v1194 = vunpack.c.h.b16 %v669
      %v1195 = vunpack.c.l.b16 %v670
      %v1196 = vunpack.c.h.b16 %v670
      %v1197 = vunpack.c.l.b16 %v671
      %v1198 = vunpack.c.h.b16 %v671
      %v1199 = vunpack.c.l.b16 %v672
      %v1200 = vunpack.c.h.b16 %v672
      %v1201 = vunpack.c.l.b16 %v673
      %v1202 = vunpack.c.h.b16 %v673
      %v1203 = vunpack.c.l.b16 %v674
      %v1204 = vunpack.c.h.b16 %v674
      %v1205 = vunpack.c.l.b16 %v675
      %v1206 = vunpack.c.h.b16 %v675
      %v1207 = vunpack.c.l.b16 %v676
      %v1208 = vunpack.c.h.b16 %v676
      %v1209 = vunpack.c.l.b16 %v677
      %v1210 = vunpack.c.h.b16 %v677
      %v1211 = vunpack.c.l.b16 %v678
      %v1212 = vunpack.c.h.b16 %v678
      %v1213 = vunpack.c.l.b16 %v679
      %v1214 = vunpack.c.h.b16 %v679
      %v1215 = vunpack.c.l.b16 %v680
      %v1216 = vunpack.c.h.b16 %v680
      %v1217 = vunpack.c.l.b16 %v681
      %v1218 = vunpack.c.h.b16 %v681
      %v1219 = vunpack.c.l.b16 %v682
      %v1220 = vunpack.c.h.b16 %v682
      %v1221 = vunpack.c.l.b16 %v683
      %v1222 = vunpack.c.h.b16 %v683
      %v1223 = vunpack.c.l.b16 %v684
      %v1224 = vunpack.c.h.b16 %v684
      %v1225 = vunpack.c.l.b16 %v685
      %v1226 = vunpack.c.h.b16 %v685
      %v1227 = vunpack.c.l.b16 %v686
      %v1228 = vunpack.c.h.b16 %v686
      %v1229 = vunpack.c.l.b16 %v687
      %v1230 = vunpack.c.h.b16 %v687
      %v1231 = vunpack.c.l.b16 %v688
      %v1232 = vunpack.c.h.b16 %v688
      %v1233 = vunpack.c.l.b16 %v689
      %v1234 = vunpack.c.h.b16 %v689
      %v1235 = vunpack.c.l.b16 %v690
      %v1236 = vunpack.c.h.b16 %v690
      %v1237 = vunpack.c.l.b16 %v691
      %v1238 = vunpack.c.h.b16 %v691
      %v1239 = vunpack.c.l.b16 %v692
      %v1240 = vunpack.c.h.b16 %v692
      %v1241 = vunpack.c.l.b16 %v693
      %v1242 = vunpack.c.h.b16 %v693
      %v1243 = vunpack.c.l.b16 %v694
      %v1244 = vunpack.c.h.b16 %v694
      %v1245 = vunpack.c.l.b16 %v695
      %v1246 = vunpack.c.h.b16 %v695
      %v1247 = vunpack.c.l.b16 %v696
      %v1248 = vunpack.c.h.b16 %v696
      %v1249 = vunpack.c.l.b16 %v697
      %v1250 = vunpack.c.h.b16 %v697
      %v1251 = vunpack.c.l.b16 %v698
      %v1252 = vunpack.c.h.b16 %v698
      %v1253 = vunpack.c.l.b16 %v699
      %v1254 = vunpack.c.h.b16 %v699
      %v1255 = vunpack.c.l.b16 %v700
      %v1256 = vunpack.c.h.b16 %v700
      %v1257 = vunpack.c.l.b16 %v701
      %v1258 = vunpack.c.h.b16 %v701
      %v1259 = vunpack.c.l.b16 %v702
      %v1260 = vunpack.c.h.b16 %v702
      %v1261 = vunpack.c.l.b16 %v703
      %v1262 = vunpack.c.h.b16 %v703
      %v1263 = vunpack.c.l.b16 %v704
      %v1264 = vunpack.c.h.b16 %v704
      %v1265 = vunpack.c.l.b16 %v705
      %v1266 = vunpack.c.h.b16 %v705
      %v1267 = vunpack.c.l.b16 %v706
      %v1268 = vunpack.c.h.b16 %v706
      %v1269 = vunpack.c.l.b16 %v707
      %v1270 = vunpack.c.h.b16 %v707
      %v1271 = vunpack.c.l.b16 %v708
      %v1272 = vunpack.c.h.b16 %v708
      %v1273 = vunpack.c.l.b16 %v709
      %v1274 = vunpack.c.h.b16 %v709
      %v1275 = vunpack.c.l.b16 %v710
      %v1276 = vunpack.c.h.b16 %v710
      %v1277 = vunpack.c.l.b16 %v711
      %v1278 = vunpack.c.h.b16 %v711
      %v1279 = vunpack.c.l.b16 %v712
      %v1280 = vunpack.c.h.b16 %v712
      %v1281 = vunpack.c.l.b16 %v713
      %v1282 = vunpack.c.h.b16 %v713
      %v1283 = vunpack.c.l.b16 %v714
      %v1284 = vunpack.c.h.b16 %v714
      %v1285 = vunpack.c.l.b16 %v715
      %v1286 = vunpack.c.h.b16 %v715
      %v1287 = vunpack.c.l.b16 %v716
      %v1288 = vunpack.c.h.b16 %v716
      %v1289 = vunpack.c.l.b16 %v717
      %v1290 = vunpack.c.h.b16 %v717
      %v1291 = vunpack.c.l.b16 %v718
      %v1292 = vunpack.c.h.b16 %v718
      %v1293 = vunpack.c.l.b16 %v719
      %v1294 = vunpack.c.h.b16 %v719
      %v1295 = vunpack.c.l.b16 %v720
      %v1296 = vunpack.c.h.b16 %v720
      %v1297 = vunpack.c.l.b16 %v721
      %v1298 = vunpack.c.h.b16 %v721
      %v1299 = vunpack.c.l.b16 %v722
      %v1300 = vunpack.c.h.b16 %v722
      %v1301 = vunpack.c.l.b16 %v723
      %v1302 = vunpack.c.h.b16 %v723
      %v1303 = vunpack.c.l.b16 %v724
      %v1304 = vunpack.c.h.b16 %v724
      %v1305 = vunpack.c.l.b16 %v725
      %v1306 = vunpack.c.h.b16 %v725
      %v1307 = vunpack.c.l.b16 %v726
      %v1308 = vunpack.c.h.b16 %v726
      %v1309 = vunpack.c.l.b16 %v727
      %v1310 = vunpack.c.h.b16 %v727
      %v1311 = vunpack.c.l.b16 %v728
      %v1312 = vunpack.c.h.b16 %v728
      %v1313 = vunpack.c.l.b16 %v729
      %v1314 = vunpack.c.h.b16 %v729
      %v1315 = vunpack.c.l.b16 %v730
      %v1316 = vunpack.c.h.b16 %v730
      %v1317 = vunpack.c.l.b16 %v731
      %v1318 = vunpack.c.h.b16 %v731
      %v1319 = vunpack.c.l.b16 %v732
      %v1320 = vunpack.c.h.b16 %v732
      %v1321 = vunpack.c.l.b16 %v733
      %v1322 = vunpack.c.h.b16 %v733
      %v1323 = vunpack.c.l.b16 %v734
      %v1324 = vunpack.c.h.b16 %v734
      %v1325 = vpack.c.b16 %v947, %v941
      %v1326 = vpack.c.b16 %v948, %v942
      %v1327 = vpack.c.b16 %v949, %v943
      %v1328 = vpack.c.b16 %v950, %v944
      %v1329 = vpack.c.b16 %v951, %v945
      %v1330 = vpack.c.b16 %v952, %v946
      %v1331 = vpack.c.b16 %v959, %v953
      %v1332 = vpack.c.b16 %v960, %v954
      %v1333 = vpack.c.b16 %v961, %v955
      %v1334 = vpack.c.b16 %v962, %v956
      %v1335 = vpack.c.b16 %v963, %v957
      %v1336 = vpack.c.b16 %v964, %v958
      %v1337 = vpack.c.b16 %v971, %v965
      %v1338 = vpack.c.b16 %v972, %v966
      %v1339 = vpack.c.b16 %v973, %v967
      %v1340 = vpack.c.b16 %v974, %v968
      %v1341 = vpack.c.b16 %v975, %v969
      %v1342 = vpack.c.b16 %v976, %v970
      %v1343 = vpack.c.b16 %v983, %v977
      %v1344 = vpack.c.b16 %v984, %v978
      %v1345 = vpack.c.b16 %v985, %v979
      %v1346 = vpack.c.b16 %v986, %v980
      %v1347 = vpack.c.b16 %v987, %v981
      %v1348 = vpack.c.b16 %v988, %v982
      %v1349 = vpack.c.b16 %v995, %v989
      %v1350 = vpack.c.b16 %v996, %v990
      %v1351 = vpack.c.b16 %v997, %v991
      %v1352 = vpack.c.b16 %v998, %v992
      %v1353 = vpack.c.b16 %v999, %v993
      %v1354 = vpack.c.b16 %v1000, %v994
      %v1355 = vpack.c.b16 %v1007, %v1001
      %v1356 = vpack.c.b16 %v1008, %v1002
      %v1357 = vpack.c.b16 %v1009, %v1003
      %v1358 = vpack.c.b16 %v1010, %v1004
      %v1359 = vpack.c.b16 %v1011, %v1005
      %v1360 = vpack.c.b16 %v1012, %v1006
      %v1361 = vpack.c.b16 %v1019, %v1013
      %v1362 = vpack.c.b16 %v1020, %v1014
      %v1363 = vpack.c.b16 %v1021, %v1015
      %v1364 = vpack.c.b16 %v1022, %v1016
      %v1365 = vpack.c.b16 %v1023, %v1017
      %v1366 = vpack.c.b16 %v1024, %v1018
      %v1367 = vpack.c.b16 %v1031, %v1025
      %v1368 = vpack.c.b16 %v1032, %v1026
      %v1369 = vpack.c.b16 %v1033, %v1027
      %v1370 = vpack.c.b16 %v1034, %v1028
      %v1371 = vpack.c.b16 %v1035, %v1029
      %v1372 = vpack.c.b16 %v1036, %v1030
      %v1373 = vpack.c.b16 %v1043, %v1037
      %v1374 = vpack.c.b16 %v1044, %v1038
      %v1375 = vpack.c.b16 %v1045, %v1039
      %v1376 = vpack.c.b16 %v1046, %v1040
      %v1377 = vpack.c.b16 %v1047, %v1041
      %v1378 = vpack.c.b16 %v1048, %v1042
      %v1379 = vpack.c.b16 %v1055, %v1049
      %v1380 = vpack.c.b16 %v1056, %v1050
      %v1381 = vpack.c.b16 %v1057, %v1051
      %v1382 = vpack.c.b16 %v1058, %v1052
      %v1383 = vpack.c.b16 %v1059, %v1053
      %v1384 = vpack.c.b16 %v1060, %v1054
      %v1385 = vpack.c.b16 %v1067, %v1061
      %v1386 = vpack.c.b16 %v1068, %v1062
      %v1387 = vpack.c.b16 %v1069, %v1063
      %v1388 = vpack.c.b16 %v1070, %v1064
      %v1389 = vpack.c.b16 %v1071, %v1065
      %v1390 = vpack.c.b16 %v1072, %v1066
      %v1391 = vpack.c.b16 %v1079, %v1073
      %v1392 = vpack.c.b16 %v1080, %v1074
      %v1393 = vpack.c.b16 %v1081, %v1075
      %v1394 = vpack.c.b16 %v1082, %v1076
      %v1395 = vpack.c.b16 %v1083, %v1077
      %v1396 = vpack.c.b16 %v1084, %v1078
      %v1397 = vpack.c.b16 %v1091, %v1085
      %v1398 = vpack.c.b16 %v1092, %v1086
      %v1399 = vpack.c.b16 %v1093, %v1087
      %v1400 = vpack.c.b16 %v1094, %v1088
      %v1401 = vpack.c.b16 %v1095, %v1089
      %v1402 = vpack.c.b16 %v1096, %v1090
      %v1403 = vpack.c.b16 %v1103, %v1097
      %v1404 = vpack.c.b16 %v1104, %v1098
      %v1405 = vpack.c.b16 %v1105, %v1099
      %v1406 = vpack.c.b16 %v1106, %v1100
      %v1407 = vpack.c.b16 %v1107, %v1101
      %v1408 = vpack.c.b16 %v1108, %v1102
      %v1409 = vpack.c.b16 %v1115, %v1109
      %v1410 = vpack.c.b16 %v1116, %v1110
      %v1411 = vpack.c.b16 %v1117, %v1111
      %v1412 = vpack.c.b16 %v1118, %v1112
      %v1413 = vpack.c.b16 %v1119, %v1113
      %v1414 = vpack.c.b16 %v1120, %v1114
      %v1415 = vpack.c.b16 %v1127, %v1121
      %v1416 = vpack.c.b16 %v1128, %v1122
      %v1417 = vpack.c.b16 %v1129, %v1123
      %v1418 = vpack.c.b16 %v1130, %v1124
      %v1419 = vpack.c.b16 %v1131, %v1125
      %v1420 = vpack.c.b16 %v1132, %v1126
      %v1421 = vpack.c.b16 %v1139, %v1133
      %v1422 = vpack.c.b16 %v1140, %v1134
      %v1423 = vpack.c.b16 %v1141, %v1135
      %v1424 = vpack.c.b16 %v1142, %v1136
      %v1425 = vpack.c.b16 %v1143, %v1137
      %v1426 = vpack.c.b16 %v1144, %v1138
      %v1427 = vpack.c.b16 %v1151, %v1145
      %v1428 = vpack.c.b16 %v1152, %v1146
      %v1429 = vpack.c.b16 %v1153, %v1147
      %v1430 = vpack.c.b16 %v1154, %v1148
      %v1431 = vpack.c.b16 %v1155, %v1149
      %v1432 = vpack.c.b16 %v1156, %v1150
      %v1433 = vpack.c.b16 %v1163, %v1157
      %v1434 = vpack.c.b16 %v1164, %v1158
      %v1435 = vpack.c.b16 %v1165, %v1159
      %v1436 = vpack.c.b16 %v1166, %v1160
      %v1437 = vpack.c.b16 %v1167, %v1161
      %v1438 = vpack.c.b16 %v1168, %v1162
      %v1439 = vpack.c.b16 %v1175, %v1169
      %v1440 = vpack.c.b16 %v1176, %v1170
      %v1441 = vpack.c.b16 %v1177, %v1171
      %v1442 = vpack.c.b16 %v1178, %v1172
      %v1443 = vpack.c.b16 %v1179, %v1173
      %v1444 = vpack.c.b16 %v1180, %v1174
      %v1445 = vpack.c.b16 %v1187, %v1181
      %v1446 = vpack.c.b16 %v1188, %v1182
      %v1447 = vpack.c.b16 %v1189, %v1183
      %v1448 = vpack.c.b16 %v1190, %v1184
      %v1449 = vpack.c.b16 %v1191, %v1185
      %v1450 = vpack.c.b16 %v1192, %v1186
      %v1451 = vpack.c.b16 %v1199, %v1193
      %v1452 = vpack.c.b16 %v1200, %v1194
      %v1453 = vpack.c.b16 %v1201, %v1195
      %v1454 = vpack.c.b16 %v1202, %v1196
      %v1455 = vpack.c.b16 %v1203, %v1197
      %v1456 = vpack.c.b16 %v1204, %v1198
      %v1457 = vpack.c.b16 %v1211, %v1205
      %v1458 = vpack.c.b16 %v1212, %v1206
      %v1459 = vpack.c.b16 %v1213, %v1207
      %v1460 = vpack.c.b16 %v1214, %v1208
      %v1461 = vpack.c.b16 %v1215, %v1209
      %v1462 = vpack.c.b16 %v1216, %v1210
      %v1463 = vpack.c.b16 %v1223, %v1217
      %v1464 = vpack.c.b16 %v1224, %v1218
      %v1465 = vpack.c.b16 %v1225, %v1219
      %v1466 = vpack.c.b16 %v1226, %v1220
      %v1467 = vpack.c.b16 %v1227, %v1221
      %v1468 = vpack.c.b16 %v1228, %v1222
      %v1469 = vpack.c.b16 %v1235, %v1229
      %v1470 = vpack.c.b16 %v1236, %v1230
      %v1471 = vpack.c.b16 %v1237, %v1231
      %v1472 = vpack.c.b16 %v1238, %v1232
      %v1473 = vpack.c.b16 %v1239, %v1233
      %v1474 = vpack.c.b16 %v1240, %v1234
      %v1475 = vpack.c.b16 %v1247, %v1241
      %v1476 = vpack.c.b16 %v1248, %v1242
      %v1477 = vpack.c.b16 %v1249, %v1243
      %v1478 = vpack.c.b16 %v1250, %v1244
      %v1479 = vpack.c.b16 %v1251, %v1245
      %v1480 = vpack.c.b16 %v1252, %v1246
      %v1481 = vpack.c.b16 %v1259, %v1253
      %v1482 = vpack.c.b16 %v1260, %v1254
      %v1483 = vpack.c.b16 %v1261, %v1255
      %v1484 = vpack.c.b16 %v1262, %v1256
      %v1485 = vpack.c.b16 %v1263, %v1257
      %v1486 = vpack.c.b16 %v1264, %v1258
      %v1487 = vpack.c.b16 %v1271, %v1265
      %v1488 = vpack.c.b16 %v1272, %v1266
      %v1489 = vpack.c.b16 %v1273, %v1267
      %v1490 = vpack.c.b16 %v1274, %v1268
      %v1491 = vpack.c.b16 %v1275, %v1269
      %v1492 = vpack.c.b16 %v1276, %v1270
      %v1493 = vpack.c.b16 %v1283, %v1277
      %v1494 = vpack.c.b16 %v1284, %v1278
      %v1495 = vpack.c.b16 %v1285, %v1279
      %v1496 = vpack.c.b16 %v1286, %v1280
      %v1497 = vpack.c.b16 %v1287, %v1281
      %v1498 = vpack.c.b16 %v1288, %v1282
      %v1499 = vpack.c.b16 %v1295, %v1289
      %v1500 = vpack.c.b16 %v1296, %v1290
      %v1501 = vpack.c.b16 %v1297, %v1291
      %v1502 = vpack.c.b16 %v1298, %v1292
      %v1503 = vpack.c.b16 %v1299, %v1293
      %v1504 = vpack.c.b16 %v1300, %v1294
      %v1505 = vpack.c.b16 %v1307, %v1301
      %v1506 = vpack.c.b16 %v1308, %v1302
      %v1507 = vpack.c.b16 %v1309, %v1303
      %v1508 = vpack.c.b16 %v1310, %v1304
      %v1509 = vpack.c.b16 %v1311, %v1305
      %v1510 = vpack.c.b16 %v1312, %v1306
      %v1511 = vpack.c.b16 %v1319, %v1313
      %v1512 = vpack.c.b16 %v1320, %v1314
      %v1513 = vpack.c.b16 %v1321, %v1315
      %v1514 = vpack.c.b16 %v1322, %v1316
      %v1515 = vpack.c.b16 %v1323, %v1317
      %v1516 = vpack.c.b16 %v1324, %v1318
      %1709 = vmatpush.bf16.msra.mxu0 %v1367
      %1710 = vmatpush.bf16.msra.mxu0 %v1361
      %1711 = vmatpush.bf16.msra.mxu0 %v1355
      %1712 = vmatpush.bf16.msra.mxu0 %v1349
      %1713 = vmatpush.bf16.msra.mxu0 %v1343
      %1714 = vmatpush.bf16.msra.mxu0 %v1337
      %1715 = vmatpush.bf16.msra.mxu0 %v1331
      %1716 = vmatpush.bf16.msra.mxu0 %v1325
      %1717 = vmatmul.bf16.gmra.mxu0 %v539
      %v1718 = vpop.f32.mrf.mxu0
      %v1719 = vadd.f32 %v737, %v1718
      %v1720 = vpop.f32.mrf.mxu0
      %1721 = vdwg.mxu0
      %1722 = vmatpush.bf16.msra.mxu0 %v1415
      %1723 = vmatpush.bf16.msra.mxu0 %v1409
      %1724 = vmatpush.bf16.msra.mxu0 %v1403
      %1725 = vmatpush.bf16.msra.mxu0 %v1397
      %1726 = vmatpush.bf16.msra.mxu0 %v1391
      %1727 = vmatpush.bf16.msra.mxu0 %v1385
      %1728 = vmatpush.bf16.msra.mxu0 %v1379
      %1729 = vmatpush.bf16.msra.mxu0 %v1373
      %1730 = vmatmul.bf16.gmra.mxu0 %v540
      %v1731 = vpop.f32.mrf.mxu0
      %v1732 = vadd.f32 %v1719, %v1731
      %v1733 = vpop.f32.mrf.mxu0
      %1734 = vdwg.mxu0
      %1735 = vmatpush.bf16.msra.mxu0 %v1463
      %1736 = vmatpush.bf16.msra.mxu0 %v1457
      %1737 = vmatpush.bf16.msra.mxu0 %v1451
      %1738 = vmatpush.bf16.msra.mxu0 %v1445
      %1739 = vmatpush.bf16.msra.mxu0 %v1439
      %1740 = vmatpush.bf16.msra.mxu0 %v1433
      %1741 = vmatpush.bf16.msra.mxu0 %v1427
      %1742 = vmatpush.bf16.msra.mxu0 %v1421
      %1743 = vmatmul.bf16.gmra.mxu0 %v541
      %v1744 = vpop.f32.mrf.mxu0
      %v1745 = vadd.f32 %v1732, %v1744
      %v1746 = vpop.f32.mrf.mxu0
      %1747 = vdwg.mxu0
      %1748 = vmatpush.bf16.msra.mxu0 %v1511
      %1749 = vmatpush.bf16.msra.mxu0 %v1505
      %1750 = vmatpush.bf16.msra.mxu0 %v1499
      %1751 = vmatpush.bf16.msra.mxu0 %v1493
      %1752 = vmatpush.bf16.msra.mxu0 %v1487
      %1753 = vmatpush.bf16.msra.mxu0 %v1481
      %1754 = vmatpush.bf16.msra.mxu0 %v1475
      %1755 = vmatpush.bf16.msra.mxu0 %v1469
      %1756 = vmatmul.bf16.gmra.mxu0 %v542
      %v1757 = vpop.f32.mrf.mxu0
      %v1758 = vadd.f32 %v1745, %v1757
      %v1759 = vpop.f32.mrf.mxu0
      %1760 = vdwg.mxu0
      %1761 = vmatpush.bf16.msra.mxu0 %v1368
      %1762 = vmatpush.bf16.msra.mxu0 %v1362
      %1763 = vmatpush.bf16.msra.mxu0 %v1356
      %1764 = vmatpush.bf16.msra.mxu0 %v1350
      %1765 = vmatpush.bf16.msra.mxu0 %v1344
      %1766 = vmatpush.bf16.msra.mxu0 %v1338
      %1767 = vmatpush.bf16.msra.mxu0 %v1332
      %1768 = vmatpush.bf16.msra.mxu0 %v1326
      %1769 = vmatmul.bf16.gmra.mxu0 %v539
      %v1770 = vpop.f32.mrf.mxu0
      %v1771 = vadd.f32 %v738, %v1770
      %v1772 = vpop.f32.mrf.mxu0
      %1773 = vdwg.mxu0
      %1774 = vmatpush.bf16.msra.mxu0 %v1416
      %1775 = vmatpush.bf16.msra.mxu0 %v1410
      %1776 = vmatpush.bf16.msra.mxu0 %v1404
      %1777 = vmatpush.bf16.msra.mxu0 %v1398
      %1778 = vmatpush.bf16.msra.mxu0 %v1392
      %1779 = vmatpush.bf16.msra.mxu0 %v1386
      %1780 = vmatpush.bf16.msra.mxu0 %v1380
      %1781 = vmatpush.bf16.msra.mxu0 %v1374
      %1782 = vmatmul.bf16.gmra.mxu0 %v540
      %v1783 = vpop.f32.mrf.mxu0
      %v1784 = vadd.f32 %v1771, %v1783
      %v1785 = vpop.f32.mrf.mxu0
      %1786 = vdwg.mxu0
      %1787 = vmatpush.bf16.msra.mxu0 %v1464
      %1788 = vmatpush.bf16.msra.mxu0 %v1458
      %1789 = vmatpush.bf16.msra.mxu0 %v1452
      %1790 = vmatpush.bf16.msra.mxu0 %v1446
      %1791 = vmatpush.bf16.msra.mxu0 %v1440
      %1792 = vmatpush.bf16.msra.mxu0 %v1434
      %1793 = vmatpush.bf16.msra.mxu0 %v1428
      %1794 = vmatpush.bf16.msra.mxu0 %v1422
      %1795 = vmatmul.bf16.gmra.mxu0 %v541
      %v1796 = vpop.f32.mrf.mxu0
      %v1797 = vadd.f32 %v1784, %v1796
      %v1798 = vpop.f32.mrf.mxu0
      %1799 = vdwg.mxu0
      %1800 = vmatpush.bf16.msra.mxu0 %v1512
      %1801 = vmatpush.bf16.msra.mxu0 %v1506
      %1802 = vmatpush.bf16.msra.mxu0 %v1500
      %1803 = vmatpush.bf16.msra.mxu0 %v1494
      %1804 = vmatpush.bf16.msra.mxu0 %v1488
      %1805 = vmatpush.bf16.msra.mxu0 %v1482
      %1806 = vmatpush.bf16.msra.mxu0 %v1476
      %1807 = vmatpush.bf16.msra.mxu0 %v1470
      %1808 = vmatmul.bf16.gmra.mxu0 %v542
      %v1809 = vpop.f32.mrf.mxu0
      %v1810 = vadd.f32 %v1797, %v1809
      %v1811 = vpop.f32.mrf.mxu0
      %1812 = vdwg.mxu0
      %1813 = vmatpush.bf16.msra.mxu0 %v1369
      %1814 = vmatpush.bf16.msra.mxu0 %v1363
      %1815 = vmatpush.bf16.msra.mxu0 %v1357
      %1816 = vmatpush.bf16.msra.mxu0 %v1351
      %1817 = vmatpush.bf16.msra.mxu0 %v1345
      %1818 = vmatpush.bf16.msra.mxu0 %v1339
      %1819 = vmatpush.bf16.msra.mxu0 %v1333
      %1820 = vmatpush.bf16.msra.mxu0 %v1327
      %1821 = vmatmul.bf16.gmra.mxu0 %v539
      %v1822 = vpop.f32.mrf.mxu0
      %v1823 = vadd.f32 %v739, %v1822
      %v1824 = vpop.f32.mrf.mxu0
      %1825 = vdwg.mxu0
      %1826 = vmatpush.bf16.msra.mxu0 %v1417
      %1827 = vmatpush.bf16.msra.mxu0 %v1411
      %1828 = vmatpush.bf16.msra.mxu0 %v1405
      %1829 = vmatpush.bf16.msra.mxu0 %v1399
      %1830 = vmatpush.bf16.msra.mxu0 %v1393
      %1831 = vmatpush.bf16.msra.mxu0 %v1387
      %1832 = vmatpush.bf16.msra.mxu0 %v1381
      %1833 = vmatpush.bf16.msra.mxu0 %v1375
      %1834 = vmatmul.bf16.gmra.mxu0 %v540
      %v1835 = vpop.f32.mrf.mxu0
      %v1836 = vadd.f32 %v1823, %v1835
      %v1837 = vpop.f32.mrf.mxu0
      %1838 = vdwg.mxu0
      %1839 = vmatpush.bf16.msra.mxu0 %v1465
      %1840 = vmatpush.bf16.msra.mxu0 %v1459
      %1841 = vmatpush.bf16.msra.mxu0 %v1453
      %1842 = vmatpush.bf16.msra.mxu0 %v1447
      %1843 = vmatpush.bf16.msra.mxu0 %v1441
      %1844 = vmatpush.bf16.msra.mxu0 %v1435
      %1845 = vmatpush.bf16.msra.mxu0 %v1429
      %1846 = vmatpush.bf16.msra.mxu0 %v1423
      %1847 = vmatmul.bf16.gmra.mxu0 %v541
      %v1848 = vpop.f32.mrf.mxu0
      %v1849 = vadd.f32 %v1836, %v1848
      %v1850 = vpop.f32.mrf.mxu0
      %1851 = vdwg.mxu0
      %1852 = vmatpush.bf16.msra.mxu0 %v1513
      %1853 = vmatpush.bf16.msra.mxu0 %v1507
      %1854 = vmatpush.bf16.msra.mxu0 %v1501
      %1855 = vmatpush.bf16.msra.mxu0 %v1495
      %1856 = vmatpush.bf16.msra.mxu0 %v1489
      %1857 = vmatpush.bf16.msra.mxu0 %v1483
      %1858 = vmatpush.bf16.msra.mxu0 %v1477
      %1859 = vmatpush.bf16.msra.mxu0 %v1471
      %1860 = vmatmul.bf16.gmra.mxu0 %v542
      %v1861 = vpop.f32.mrf.mxu0
      %v1862 = vadd.f32 %v1849, %v1861
      %v1863 = vpop.f32.mrf.mxu0
      %1864 = vdwg.mxu0
      %1865 = vmatpush.bf16.msra.mxu0 %v1370
      %1866 = vmatpush.bf16.msra.mxu0 %v1364
      %1867 = vmatpush.bf16.msra.mxu0 %v1358
      %1868 = vmatpush.bf16.msra.mxu0 %v1352
      %1869 = vmatpush.bf16.msra.mxu0 %v1346
      %1870 = vmatpush.bf16.msra.mxu0 %v1340
      %1871 = vmatpush.bf16.msra.mxu0 %v1334
      %1872 = vmatpush.bf16.msra.mxu0 %v1328
      %1873 = vmatmul.bf16.gmra.mxu0 %v539
      %v1874 = vpop.f32.mrf.mxu0
      %v1875 = vadd.f32 %v740, %v1874
      %v1876 = vpop.f32.mrf.mxu0
      %1877 = vdwg.mxu0
      %1878 = vmatpush.bf16.msra.mxu0 %v1418
      %1879 = vmatpush.bf16.msra.mxu0 %v1412
      %1880 = vmatpush.bf16.msra.mxu0 %v1406
      %1881 = vmatpush.bf16.msra.mxu0 %v1400
      %1882 = vmatpush.bf16.msra.mxu0 %v1394
      %1883 = vmatpush.bf16.msra.mxu0 %v1388
      %1884 = vmatpush.bf16.msra.mxu0 %v1382
      %1885 = vmatpush.bf16.msra.mxu0 %v1376
      %1886 = vmatmul.bf16.gmra.mxu0 %v540
      %v1887 = vpop.f32.mrf.mxu0
      %v1888 = vadd.f32 %v1875, %v1887
      %v1889 = vpop.f32.mrf.mxu0
      %1890 = vdwg.mxu0
      %1891 = vmatpush.bf16.msra.mxu0 %v1466
      %1892 = vmatpush.bf16.msra.mxu0 %v1460
      %1893 = vmatpush.bf16.msra.mxu0 %v1454
      %1894 = vmatpush.bf16.msra.mxu0 %v1448
      %1895 = vmatpush.bf16.msra.mxu0 %v1442
      %1896 = vmatpush.bf16.msra.mxu0 %v1436
      %1897 = vmatpush.bf16.msra.mxu0 %v1430
      %1898 = vmatpush.bf16.msra.mxu0 %v1424
      %1899 = vmatmul.bf16.gmra.mxu0 %v541
      %v1900 = vpop.f32.mrf.mxu0
      %v1901 = vadd.f32 %v1888, %v1900
      %v1902 = vpop.f32.mrf.mxu0
      %1903 = vdwg.mxu0
      %1904 = vmatpush.bf16.msra.mxu0 %v1514
      %1905 = vmatpush.bf16.msra.mxu0 %v1508
      %1906 = vmatpush.bf16.msra.mxu0 %v1502
      %1907 = vmatpush.bf16.msra.mxu0 %v1496
      %1908 = vmatpush.bf16.msra.mxu0 %v1490
      %1909 = vmatpush.bf16.msra.mxu0 %v1484
      %1910 = vmatpush.bf16.msra.mxu0 %v1478
      %1911 = vmatpush.bf16.msra.mxu0 %v1472
      %1912 = vmatmul.bf16.gmra.mxu0 %v542
      %v1913 = vpop.f32.mrf.mxu0
      %v1914 = vadd.f32 %v1901, %v1913
      %v1915 = vpop.f32.mrf.mxu0
      %1916 = vdwg.mxu0
      %1917 = vmatpush.bf16.msra.mxu0 %v1371
      %1918 = vmatpush.bf16.msra.mxu0 %v1365
      %1919 = vmatpush.bf16.msra.mxu0 %v1359
      %1920 = vmatpush.bf16.msra.mxu0 %v1353
      %1921 = vmatpush.bf16.msra.mxu0 %v1347
      %1922 = vmatpush.bf16.msra.mxu0 %v1341
      %1923 = vmatpush.bf16.msra.mxu0 %v1335
      %1924 = vmatpush.bf16.msra.mxu0 %v1329
      %1925 = vmatmul.bf16.gmra.mxu0 %v539
      %v1926 = vpop.f32.mrf.mxu0
      %v1927 = vadd.f32 %v741, %v1926
      %v1928 = vpop.f32.mrf.mxu0
      %1929 = vdwg.mxu0
      %1930 = vmatpush.bf16.msra.mxu0 %v1419
      %1931 = vmatpush.bf16.msra.mxu0 %v1413
      %1932 = vmatpush.bf16.msra.mxu0 %v1407
      %1933 = vmatpush.bf16.msra.mxu0 %v1401
      %1934 = vmatpush.bf16.msra.mxu0 %v1395
      %1935 = vmatpush.bf16.msra.mxu0 %v1389
      %1936 = vmatpush.bf16.msra.mxu0 %v1383
      %1937 = vmatpush.bf16.msra.mxu0 %v1377
      %1938 = vmatmul.bf16.gmra.mxu0 %v540
      %v1939 = vpop.f32.mrf.mxu0
      %v1940 = vadd.f32 %v1927, %v1939
      %v1941 = vpop.f32.mrf.mxu0
      %1942 = vdwg.mxu0
      %1943 = vmatpush.bf16.msra.mxu0 %v1467
      %1944 = vmatpush.bf16.msra.mxu0 %v1461
      %1945 = vmatpush.bf16.msra.mxu0 %v1455
      %1946 = vmatpush.bf16.msra.mxu0 %v1449
      %1947 = vmatpush.bf16.msra.mxu0 %v1443
      %1948 = vmatpush.bf16.msra.mxu0 %v1437
      %1949 = vmatpush.bf16.msra.mxu0 %v1431
      %1950 = vmatpush.bf16.msra.mxu0 %v1425
      %1951 = vmatmul.bf16.gmra.mxu0 %v541
      %v1952 = vpop.f32.mrf.mxu0
      %v1953 = vadd.f32 %v1940, %v1952
      %v1954 = vpop.f32.mrf.mxu0
      %1955 = vdwg.mxu0
      %1956 = vmatpush.bf16.msra.mxu0 %v1515
      %1957 = vmatpush.bf16.msra.mxu0 %v1509
      %1958 = vmatpush.bf16.msra.mxu0 %v1503
      %1959 = vmatpush.bf16.msra.mxu0 %v1497
      %1960 = vmatpush.bf16.msra.mxu0 %v1491
      %1961 = vmatpush.bf16.msra.mxu0 %v1485
      %1962 = vmatpush.bf16.msra.mxu0 %v1479
      %1963 = vmatpush.bf16.msra.mxu0 %v1473
      %1964 = vmatmul.bf16.gmra.mxu0 %v542
      %v1965 = vpop.f32.mrf.mxu0
      %v1966 = vadd.f32 %v1953, %v1965
      %v1967 = vpop.f32.mrf.mxu0
      %1968 = vdwg.mxu0
      %1969 = vmatpush.bf16.msra.mxu0 %v1372
      %1970 = vmatpush.bf16.msra.mxu0 %v1366
      %1971 = vmatpush.bf16.msra.mxu0 %v1360
      %1972 = vmatpush.bf16.msra.mxu0 %v1354
      %1973 = vmatpush.bf16.msra.mxu0 %v1348
      %1974 = vmatpush.bf16.msra.mxu0 %v1342
      %1975 = vmatpush.bf16.msra.mxu0 %v1336
      %1976 = vmatpush.bf16.msra.mxu0 %v1330
      %1977 = vmatmul.bf16.gmra.mxu0 %v539
      %v1978 = vpop.f32.mrf.mxu0
      %v1979 = vadd.f32 %v742, %v1978
      %v1980 = vpop.f32.mrf.mxu0
      %1981 = vdwg.mxu0
      %1982 = vmatpush.bf16.msra.mxu0 %v1420
      %1983 = vmatpush.bf16.msra.mxu0 %v1414
      %1984 = vmatpush.bf16.msra.mxu0 %v1408
      %1985 = vmatpush.bf16.msra.mxu0 %v1402
      %1986 = vmatpush.bf16.msra.mxu0 %v1396
      %1987 = vmatpush.bf16.msra.mxu0 %v1390
      %1988 = vmatpush.bf16.msra.mxu0 %v1384
      %1989 = vmatpush.bf16.msra.mxu0 %v1378
      %1990 = vmatmul.bf16.gmra.mxu0 %v540
      %v1991 = vpop.f32.mrf.mxu0
      %v1992 = vadd.f32 %v1979, %v1991
      %v1993 = vpop.f32.mrf.mxu0
      %1994 = vdwg.mxu0
      %1995 = vmatpush.bf16.msra.mxu0 %v1468
      %1996 = vmatpush.bf16.msra.mxu0 %v1462
      %1997 = vmatpush.bf16.msra.mxu0 %v1456
      %1998 = vmatpush.bf16.msra.mxu0 %v1450
      %1999 = vmatpush.bf16.msra.mxu0 %v1444
      %2000 = vmatpush.bf16.msra.mxu0 %v1438
      %2001 = vmatpush.bf16.msra.mxu0 %v1432
      %2002 = vmatpush.bf16.msra.mxu0 %v1426
      %2003 = vmatmul.bf16.gmra.mxu0 %v541
      %v2004 = vpop.f32.mrf.mxu0
      %v2005 = vadd.f32 %v1992, %v2004
      %v2006 = vpop.f32.mrf.mxu0
      %2007 = vdwg.mxu0
      %2008 = vmatpush.bf16.msra.mxu0 %v1516
      %2009 = vmatpush.bf16.msra.mxu0 %v1510
      %2010 = vmatpush.bf16.msra.mxu0 %v1504
      %2011 = vmatpush.bf16.msra.mxu0 %v1498
      %2012 = vmatpush.bf16.msra.mxu0 %v1492
      %2013 = vmatpush.bf16.msra.mxu0 %v1486
      %2014 = vmatpush.bf16.msra.mxu0 %v1480
      %2015 = vmatpush.bf16.msra.mxu0 %v1474
      %2016 = vmatmul.bf16.gmra.mxu0 %v542
      %v2017 = vpop.f32.mrf.mxu0
      %v2018 = vadd.f32 %v2005, %v2017
      %v2019 = vpop.f32.mrf.mxu0
      %2020 = vdwg.mxu0
      %v2021 = vmax.f32 %v1758, 0.0
      %v2022 = vmax.f32 %v1810, 0.0
      %v2023 = vmax.f32 %v1862, 0.0
      %v2024 = vmax.f32 %v1914, 0.0
      %v2025 = vmax.f32 %v1966, 0.0
      %v2026 = vmax.f32 %v2018, 0.0
      %v2027 = vpack.c.bf16 %v2021, %v2021
      %v2028 = vpack.c.bf16 %v2022, %v2022
      %v2029 = vpack.c.bf16 %v2023, %v2023
      %v2030 = vpack.c.bf16 %v2024, %v2024
      %v2031 = vpack.c.bf16 %v2025, %v2025
      %v2032 = vpack.c.bf16 %v2026, %v2026
      %v2033 = vld [vmem:[#allocation12] sm:$0xf]
      %v2034 = vld [vmem:[#allocation12 + $0x4] sm:$0xf]
      %v2035 = vld [vmem:[#allocation12 + $0x8] sm:$0xf]
      %v2036 = vld [vmem:[#allocation12 + $0xc] sm:$0xf]
      %v2037 = vld [vmem:[#allocation12 + $0x10] sm:$0xf]
      %v2038 = vld [vmem:[#allocation12 + $0x14] sm:$0xf]
      %v2039 = vld [vmem:[#allocation12 + $0x18] sm:$0xf]
      %v2040 = vld [vmem:[#allocation12 + $0x1c] sm:$0xf]
      %v2041 = vld [vmem:[#allocation12 + $0x20] sm:$0xf]
      %v2042 = vld [vmem:[#allocation12 + $0x24] sm:$0xf]
      %v2043 = vld [vmem:[#allocation12 + $0x28] sm:$0xf]
      %v2044 = vld [vmem:[#allocation12 + $0x2c] sm:$0xf]
      %v2045 = vld [vmem:[#allocation12 + $0x30] sm:$0xf]
      %v2046 = vld [vmem:[#allocation12 + $0x34] sm:$0xf]
      %v2047 = vld [vmem:[#allocation12 + $0x38] sm:$0xf]
      %v2048 = vld [vmem:[#allocation12 + $0x3c] sm:$0xf]
      %v2049 = vld [vmem:[#allocation12 + $0x40] sm:$0xf]
      %v2050 = vld [vmem:[#allocation12 + $0x44] sm:$0xf]
      %v2051 = vld [vmem:[#allocation12 + $0x48] sm:$0xf]
      %v2052 = vld [vmem:[#allocation12 + $0x4c] sm:$0xf]
      %v2053 = vld [vmem:[#allocation12 + $0x50] sm:$0xf]
      %v2054 = vld [vmem:[#allocation12 + $0x54] sm:$0xf]
      %v2055 = vld [vmem:[#allocation12 + $0x58] sm:$0xf]
      %v2056 = vld [vmem:[#allocation12 + $0x5c] sm:$0xf]
      %v2057 = vld [vmem:[#allocation12 + $0x60] sm:$0xf]
      %v2058 = vld [vmem:[#allocation12 + $0x64] sm:$0xf]
      %v2059 = vld [vmem:[#allocation12 + $0x68] sm:$0xf]
      %v2060 = vld [vmem:[#allocation12 + $0x6c] sm:$0xf]
      %v2061 = vld [vmem:[#allocation12 + $0x70] sm:$0xf]
      %v2062 = vld [vmem:[#allocation12 + $0x74] sm:$0xf]
      %v2063 = vld [vmem:[#allocation12 + $0x78] sm:$0xf]
      %v2064 = vld [vmem:[#allocation12 + $0x7c] sm:$0xf]
      %v2065 = vld [vmem:[#allocation12 + $0x80] sm:$0xf]
      %v2066 = vld [vmem:[#allocation12 + $0x84] sm:$0xf]
      %v2067 = vld [vmem:[#allocation12 + $0x88] sm:$0xf]
      %v2068 = vld [vmem:[#allocation12 + $0x8c] sm:$0xf]
      %v2069 = vld [vmem:[#allocation12 + $0x90] sm:$0xf]
      %v2070 = vld [vmem:[#allocation12 + $0x94] sm:$0xf]
      %v2071 = vld [vmem:[#allocation12 + $0x98] sm:$0xf]
      %v2072 = vld [vmem:[#allocation12 + $0x9c] sm:$0xf]
      %v2073 = vld [vmem:[#allocation12 + $0xa0] sm:$0xf]
      %v2074 = vld [vmem:[#allocation12 + $0xa4] sm:$0xf]
      %v2075 = vld [vmem:[#allocation12 + $0xa8] sm:$0xf]
      %v2076 = vld [vmem:[#allocation12 + $0xac] sm:$0xf]
      %v2077 = vld [vmem:[#allocation12 + $0xb0] sm:$0xf]
      %v2078 = vld [vmem:[#allocation12 + $0xb4] sm:$0xf]
      %v2079 = vld [vmem:[#allocation12 + $0xb8] sm:$0xf]
      %v2080 = vld [vmem:[#allocation12 + $0xbc] sm:$0xf]
      %v2081 = vld [vmem:[#allocation12 + $0xc0] sm:$0xf]
      %v2082 = vld [vmem:[#allocation12 + $0xc4] sm:$0xf]
      %v2083 = vld [vmem:[#allocation12 + $0xc8] sm:$0xf]
      %v2084 = vld [vmem:[#allocation12 + $0xcc] sm:$0xf]
      %v2085 = vld [vmem:[#allocation12 + $0xd0] sm:$0xf]
      %v2086 = vld [vmem:[#allocation12 + $0xd4] sm:$0xf]
      %v2087 = vld [vmem:[#allocation12 + $0xd8] sm:$0xf]
      %v2088 = vld [vmem:[#allocation12 + $0xdc] sm:$0xf]
      %v2089 = vld [vmem:[#allocation12 + $0xe0] sm:$0xf]
      %v2090 = vld [vmem:[#allocation12 + $0xe4] sm:$0xf]
      %v2091 = vld [vmem:[#allocation12 + $0xe8] sm:$0xf]
      %v2092 = vld [vmem:[#allocation12 + $0xec] sm:$0xf]
      %v2093 = vld [vmem:[#allocation12 + $0xf0] sm:$0xf]
      %v2094 = vld [vmem:[#allocation12 + $0xf4] sm:$0xf]
      %v2095 = vld [vmem:[#allocation12 + $0xf8] sm:$0xf]
      %v2096 = vld [vmem:[#allocation12 + $0xfc] sm:$0xf]
      %v2097 = vld [vmem:[#allocation12 + $0x100] sm:$0xf]
      %v2098 = vld [vmem:[#allocation12 + $0x104] sm:$0xf]
      %v2099 = vld [vmem:[#allocation12 + $0x108] sm:$0xf]
      %v2100 = vld [vmem:[#allocation12 + $0x10c] sm:$0xf]
      %v2101 = vld [vmem:[#allocation12 + $0x110] sm:$0xf]
      %v2102 = vld [vmem:[#allocation12 + $0x114] sm:$0xf]
      %v2103 = vld [vmem:[#allocation12 + $0x118] sm:$0xf]
      %v2104 = vld [vmem:[#allocation12 + $0x11c] sm:$0xf]
      %v2105 = vld [vmem:[#allocation12 + $0x120] sm:$0xf]
      %v2106 = vld [vmem:[#allocation12 + $0x124] sm:$0xf]
      %v2107 = vld [vmem:[#allocation12 + $0x128] sm:$0xf]
      %v2108 = vld [vmem:[#allocation12 + $0x12c] sm:$0xf]
      %v2109 = vld [vmem:[#allocation12 + $0x130] sm:$0xf]
      %v2110 = vld [vmem:[#allocation12 + $0x134] sm:$0xf]
      %v2111 = vld [vmem:[#allocation12 + $0x138] sm:$0xf]
      %v2112 = vld [vmem:[#allocation12 + $0x13c] sm:$0xf]
      %v2113 = vld [vmem:[#allocation12 + $0x140] sm:$0xf]
      %v2114 = vld [vmem:[#allocation12 + $0x144] sm:$0xf]
      %v2115 = vld [vmem:[#allocation12 + $0x148] sm:$0xf]
      %v2116 = vld [vmem:[#allocation12 + $0x14c] sm:$0xf]
      %v2117 = vld [vmem:[#allocation12 + $0x150] sm:$0xf]
      %v2118 = vld [vmem:[#allocation12 + $0x154] sm:$0xf]
      %v2119 = vld [vmem:[#allocation12 + $0x158] sm:$0xf]
      %v2120 = vld [vmem:[#allocation12 + $0x15c] sm:$0xf]
      %v2121 = vld [vmem:[#allocation12 + $0x160] sm:$0xf]
      %v2122 = vld [vmem:[#allocation12 + $0x164] sm:$0xf]
      %v2123 = vld [vmem:[#allocation12 + $0x168] sm:$0xf]
      %v2124 = vld [vmem:[#allocation12 + $0x16c] sm:$0xf]
      %v2125 = vld [vmem:[#allocation12 + $0x170] sm:$0xf]
      %v2126 = vld [vmem:[#allocation12 + $0x174] sm:$0xf]
      %v2127 = vld [vmem:[#allocation12 + $0x178] sm:$0xf]
      %v2128 = vld [vmem:[#allocation12 + $0x17c] sm:$0xf]
      %v2129 = vld [vmem:[%s6] sm:$0x1]
      %v2131 = vperm.slane %v2129, 0
      %v2229 = vunpack.c.l.b16 %v2033
      %v2230 = vunpack.c.l.b16 %v2034
      %v2231 = vunpack.c.l.b16 %v2035
      %v2232 = vunpack.c.l.b16 %v2036
      %v2233 = vunpack.c.l.b16 %v2037
      %v2234 = vunpack.c.l.b16 %v2038
      %v2235 = vunpack.c.l.b16 %v2039
      %v2236 = vunpack.c.l.b16 %v2040
      %v2237 = vunpack.c.l.b16 %v2041
      %v2238 = vunpack.c.l.b16 %v2042
      %v2239 = vunpack.c.l.b16 %v2043
      %v2240 = vunpack.c.l.b16 %v2044
      %v2241 = vunpack.c.l.b16 %v2045
      %v2242 = vunpack.c.l.b16 %v2046
      %v2243 = vunpack.c.l.b16 %v2047
      %v2244 = vunpack.c.l.b16 %v2048
      %v2245 = vunpack.c.l.b16 %v2049
      %v2246 = vunpack.c.l.b16 %v2050
      %v2247 = vunpack.c.l.b16 %v2051
      %v2248 = vunpack.c.l.b16 %v2052
      %v2249 = vunpack.c.l.b16 %v2053
      %v2250 = vunpack.c.l.b16 %v2054
      %v2251 = vunpack.c.l.b16 %v2055
      %v2252 = vunpack.c.l.b16 %v2056
      %v2253 = vunpack.c.l.b16 %v2057
      %v2254 = vunpack.c.l.b16 %v2058
      %v2255 = vunpack.c.l.b16 %v2059
      %v2256 = vunpack.c.l.b16 %v2060
      %v2257 = vunpack.c.l.b16 %v2061
      %v2258 = vunpack.c.l.b16 %v2062
      %v2259 = vunpack.c.l.b16 %v2063
      %v2260 = vunpack.c.l.b16 %v2064
      %v2261 = vunpack.c.l.b16 %v2065
      %v2262 = vunpack.c.l.b16 %v2066
      %v2263 = vunpack.c.l.b16 %v2067
      %v2264 = vunpack.c.l.b16 %v2068
      %v2265 = vunpack.c.l.b16 %v2069
      %v2266 = vunpack.c.l.b16 %v2070
      %v2267 = vunpack.c.l.b16 %v2071
      %v2268 = vunpack.c.l.b16 %v2072
      %v2269 = vunpack.c.l.b16 %v2073
      %v2270 = vunpack.c.l.b16 %v2074
      %v2271 = vunpack.c.l.b16 %v2075
      %v2272 = vunpack.c.l.b16 %v2076
      %v2273 = vunpack.c.l.b16 %v2077
      %v2274 = vunpack.c.l.b16 %v2078
      %v2275 = vunpack.c.l.b16 %v2079
      %v2276 = vunpack.c.l.b16 %v2080
      %v2277 = vunpack.c.l.b16 %v2081
      %v2278 = vunpack.c.l.b16 %v2082
      %v2279 = vunpack.c.l.b16 %v2083
      %v2280 = vunpack.c.l.b16 %v2084
      %v2281 = vunpack.c.l.b16 %v2085
      %v2282 = vunpack.c.l.b16 %v2086
      %v2283 = vunpack.c.l.b16 %v2087
      %v2284 = vunpack.c.l.b16 %v2088
      %v2285 = vunpack.c.l.b16 %v2089
      %v2286 = vunpack.c.l.b16 %v2090
      %v2287 = vunpack.c.l.b16 %v2091
      %v2288 = vunpack.c.l.b16 %v2092
      %v2289 = vunpack.c.l.b16 %v2093
      %v2290 = vunpack.c.l.b16 %v2094
      %v2291 = vunpack.c.l.b16 %v2095
      %v2292 = vunpack.c.l.b16 %v2096
      %v2293 = vunpack.c.l.b16 %v2097
      %v2294 = vunpack.c.l.b16 %v2098
      %v2295 = vunpack.c.l.b16 %v2099
      %v2296 = vunpack.c.l.b16 %v2100
      %v2297 = vunpack.c.l.b16 %v2101
      %v2298 = vunpack.c.l.b16 %v2102
      %v2299 = vunpack.c.l.b16 %v2103
      %v2300 = vunpack.c.l.b16 %v2104
      %v2301 = vunpack.c.l.b16 %v2105
      %v2302 = vunpack.c.l.b16 %v2106
      %v2303 = vunpack.c.l.b16 %v2107
      %v2304 = vunpack.c.l.b16 %v2108
      %v2305 = vunpack.c.l.b16 %v2109
      %v2306 = vunpack.c.l.b16 %v2110
      %v2307 = vunpack.c.l.b16 %v2111
      %v2308 = vunpack.c.l.b16 %v2112
      %v2309 = vunpack.c.l.b16 %v2113
      %v2310 = vunpack.c.l.b16 %v2114
      %v2311 = vunpack.c.l.b16 %v2115
      %v2312 = vunpack.c.l.b16 %v2116
      %v2313 = vunpack.c.l.b16 %v2117
      %v2314 = vunpack.c.l.b16 %v2118
      %v2315 = vunpack.c.l.b16 %v2119
      %v2316 = vunpack.c.l.b16 %v2120
      %v2317 = vunpack.c.l.b16 %v2121
      %v2318 = vunpack.c.l.b16 %v2122
      %v2319 = vunpack.c.l.b16 %v2123
      %v2320 = vunpack.c.l.b16 %v2124
      %v2321 = vunpack.c.l.b16 %v2125
      %v2322 = vunpack.c.l.b16 %v2126
      %v2323 = vunpack.c.l.b16 %v2127
      %v2324 = vunpack.c.l.b16 %v2128
      %v2325 = vpack.c.b16 %v2230, %v2229
      %v2326 = vpack.c.b16 %v2232, %v2231
      %v2327 = vpack.c.b16 %v2234, %v2233
      %v2328 = vpack.c.b16 %v2236, %v2235
      %v2329 = vpack.c.b16 %v2238, %v2237
      %v2330 = vpack.c.b16 %v2240, %v2239
      %v2331 = vpack.c.b16 %v2242, %v2241
      %v2332 = vpack.c.b16 %v2244, %v2243
      %v2333 = vpack.c.b16 %v2246, %v2245
      %v2334 = vpack.c.b16 %v2248, %v2247
      %v2335 = vpack.c.b16 %v2250, %v2249
      %v2336 = vpack.c.b16 %v2252, %v2251
      %v2337 = vpack.c.b16 %v2254, %v2253
      %v2338 = vpack.c.b16 %v2256, %v2255
      %v2339 = vpack.c.b16 %v2258, %v2257
      %v2340 = vpack.c.b16 %v2260, %v2259
      %v2341 = vpack.c.b16 %v2262, %v2261
      %v2342 = vpack.c.b16 %v2264, %v2263
      %v2343 = vpack.c.b16 %v2266, %v2265
      %v2344 = vpack.c.b16 %v2268, %v2267
      %v2345 = vpack.c.b16 %v2270, %v2269
      %v2346 = vpack.c.b16 %v2272, %v2271
      %v2347 = vpack.c.b16 %v2274, %v2273
      %v2348 = vpack.c.b16 %v2276, %v2275
      %v2349 = vpack.c.b16 %v2278, %v2277
      %v2350 = vpack.c.b16 %v2280, %v2279
      %v2351 = vpack.c.b16 %v2282, %v2281
      %v2352 = vpack.c.b16 %v2284, %v2283
      %v2353 = vpack.c.b16 %v2286, %v2285
      %v2354 = vpack.c.b16 %v2288, %v2287
      %v2355 = vpack.c.b16 %v2290, %v2289
      %v2356 = vpack.c.b16 %v2292, %v2291
      %v2357 = vpack.c.b16 %v2294, %v2293
      %v2358 = vpack.c.b16 %v2296, %v2295
      %v2359 = vpack.c.b16 %v2298, %v2297
      %v2360 = vpack.c.b16 %v2300, %v2299
      %v2361 = vpack.c.b16 %v2302, %v2301
      %v2362 = vpack.c.b16 %v2304, %v2303
      %v2363 = vpack.c.b16 %v2306, %v2305
      %v2364 = vpack.c.b16 %v2308, %v2307
      %v2365 = vpack.c.b16 %v2310, %v2309
      %v2366 = vpack.c.b16 %v2312, %v2311
      %v2367 = vpack.c.b16 %v2314, %v2313
      %v2368 = vpack.c.b16 %v2316, %v2315
      %v2369 = vpack.c.b16 %v2318, %v2317
      %v2370 = vpack.c.b16 %v2320, %v2319
      %v2371 = vpack.c.b16 %v2322, %v2321
      %v2372 = vpack.c.b16 %v2324, %v2323
      %2421 = vmatpush.bf16.msra.mxu0 %v2332
      %2422 = vmatpush.bf16.msra.mxu0 %v2331
      %2423 = vmatpush.bf16.msra.mxu0 %v2330
      %2424 = vmatpush.bf16.msra.mxu0 %v2329
      %2425 = vmatpush.bf16.msra.mxu0 %v2328
      %2426 = vmatpush.bf16.msra.mxu0 %v2327
      %2427 = vmatpush.bf16.msra.mxu0 %v2326
      %2428 = vmatpush.bf16.msra.mxu0 %v2325
      %2429 = vmatmul.bf16.gmra.mxu0 %v2027
      %v2430 = vpop.f32.mrf.mxu0
      %v2431 = vadd.f32 %v2131, %v2430
      %v2432 = vpop.f32.mrf.mxu0
      %2433 = vdwg.mxu0
      %2434 = vmatpush.bf16.msra.mxu0 %v2340
      %2435 = vmatpush.bf16.msra.mxu0 %v2339
      %2436 = vmatpush.bf16.msra.mxu0 %v2338
      %2437 = vmatpush.bf16.msra.mxu0 %v2337
      %2438 = vmatpush.bf16.msra.mxu0 %v2336
      %2439 = vmatpush.bf16.msra.mxu0 %v2335
      %2440 = vmatpush.bf16.msra.mxu0 %v2334
      %2441 = vmatpush.bf16.msra.mxu0 %v2333
      %2442 = vmatmul.bf16.gmra.mxu0 %v2028
      %v2443 = vpop.f32.mrf.mxu0
      %v2444 = vadd.f32 %v2431, %v2443
      %v2445 = vpop.f32.mrf.mxu0
      %2446 = vdwg.mxu0
      %2447 = vmatpush.bf16.msra.mxu0 %v2348
      %2448 = vmatpush.bf16.msra.mxu0 %v2347
      %2449 = vmatpush.bf16.msra.mxu0 %v2346
      %2450 = vmatpush.bf16.msra.mxu0 %v2345
      %2451 = vmatpush.bf16.msra.mxu0 %v2344
      %2452 = vmatpush.bf16.msra.mxu0 %v2343
      %2453 = vmatpush.bf16.msra.mxu0 %v2342
      %2454 = vmatpush.bf16.msra.mxu0 %v2341
      %2455 = vmatmul.bf16.gmra.mxu0 %v2029
      %v2456 = vpop.f32.mrf.mxu0
      %v2457 = vadd.f32 %v2444, %v2456
      %v2458 = vpop.f32.mrf.mxu0
      %2459 = vdwg.mxu0
      %2460 = vmatpush.bf16.msra.mxu0 %v2356
      %2461 = vmatpush.bf16.msra.mxu0 %v2355
      %2462 = vmatpush.bf16.msra.mxu0 %v2354
      %2463 = vmatpush.bf16.msra.mxu0 %v2353
      %2464 = vmatpush.bf16.msra.mxu0 %v2352
      %2465 = vmatpush.bf16.msra.mxu0 %v2351
      %2466 = vmatpush.bf16.msra.mxu0 %v2350
      %2467 = vmatpush.bf16.msra.mxu0 %v2349
      %2468 = vmatmul.bf16.gmra.mxu0 %v2030
      %v2469 = vpop.f32.mrf.mxu0
      %v2470 = vadd.f32 %v2457, %v2469
      %v2471 = vpop.f32.mrf.mxu0
      %2472 = vdwg.mxu0
      %2473 = vmatpush.bf16.msra.mxu0 %v2364
      %2474 = vmatpush.bf16.msra.mxu0 %v2363
      %2475 = vmatpush.bf16.msra.mxu0 %v2362
      %2476 = vmatpush.bf16.msra.mxu0 %v2361
      %2477 = vmatpush.bf16.msra.mxu0 %v2360
      %2478 = vmatpush.bf16.msra.mxu0 %v2359
      %2479 = vmatpush.bf16.msra.mxu0 %v2358
      %2480 = vmatpush.bf16.msra.mxu0 %v2357
      %2481 = vmatmul.bf16.gmra.mxu0 %v2031
      %v2482 = vpop.f32.mrf.mxu0
      %v2483 = vadd.f32 %v2470, %v2482
      %v2484 = vpop.f32.mrf.mxu0
      %2485 = vdwg.mxu0
      %2486 = vmatpush.bf16.msra.mxu0 %v2372
      %2487 = vmatpush.bf16.msra.mxu0 %v2371
      %2488 = vmatpush.bf16.msra.mxu0 %v2370
      %2489 = vmatpush.bf16.msra.mxu0 %v2369
      %2490 = vmatpush.bf16.msra.mxu0 %v2368
      %2491 = vmatpush.bf16.msra.mxu0 %v2367
      %2492 = vmatpush.bf16.msra.mxu0 %v2366
      %2493 = vmatpush.bf16.msra.mxu0 %v2365
      %2494 = vmatmul.bf16.gmra.mxu0 %v2032
      %v2495 = vpop.f32.mrf.mxu0
      %v2496 = vadd.f32 %v2483, %v2495
      %v2497 = vpop.f32.mrf.mxu0
      %2498 = vdwg.mxu0
      %2499 = vst [vmem:[#allocation14] sm:$0xff] %v2496
    $region61: #{tpu_custom_call.1} parent=1 // pred_fallthru
      _
    // Predicated region
    $region62: #{tpu_custom_call.1} parent=1 // pred_check
      _
    $region63: #{tpu_custom_call.1} parent=1 // pred_check_branch
      %2501 = sbr.rel (0) target = $region65
    $region64: #{tpu_custom_call.1} parent=1 // pred_region
      %2503 = vsyncadd [#allocation5], 0
      %s2505 = sshll.u32 [#allocation14], 4
      %s2506 = int_to_ptr.vmem [resolvable:$true] %s2505
      %s2507 = sshll.u32 %s7, 4
      %s2508 = int_to_ptr.hbm [resolvable:$true] %s2507
      %2510 = dma.vmem_to_hbm [thread:$0]  %s2506, 128, %s2508, [#allocation5]
    $region65: #{tpu_custom_call.1} parent=1 // pred_fallthru
      _
    // Predicated region
    $region66: #{tpu_custom_call.1} parent=1 // pred_check
      _
    $region67: #{tpu_custom_call.1} parent=1 // pred_check_branch
      %2512 = sbr.rel (0) target = $region69
    $region68: #{tpu_custom_call.1} parent=1 // pred_region
      %2514 = dma.done [#allocation5], 128
    $region69: #{tpu_custom_call.1} parent=1 // pred_fallthru
      _
    %2515 = vsyncpa [#allocation4], 1
    %2516 = vsyncpa [#allocation7], 1
    %2517 = vsyncpa [#allocation10], 1
    %2518 = vsyncpa [#allocation13], 1
    %2519 = vsyncpa [#allocation5], 1

</llo_original>
